<compile_context>
chip_gen: v7x
topology: tpu7x:2x2x1
jax: 0.10.0
libtpu: 0.0.40
codegen_flags: <defaults>
</compile_context>

<pallas_src>
import functools

import jax
import jax.numpy as jnp
from jax.experimental import pallas as pl
from jax.experimental.pallas import tpu as pltpu

# ----------------------------- static config --------------------------------
N = 6                     # number of "agent" rows per state
INPUT_DIM = 7             # per-row feature dim
MLP_DIMS = [32, 16, 5]    # per-row MLP
H1, H2, H3 = 100, 50, 1   # hard-coded head sizes in mlp()

# The module hard-codes Linear(30, 100) right after Flatten(0, -1):
assert N * MLP_DIMS[-1] == 30, "N * mlp_dims[-1] must equal 30 (Linear(30,100))"


def _pad8(x):
    return (x + 7) // 8 * 8


IN_FLAT = N * INPUT_DIM          # 42  (flattened per-state input)
IN_PAD = _pad8(IN_FLAT)          # 48
D1 = N * MLP_DIMS[0]             # 192 (block-diag layer-1 output)
D2 = N * MLP_DIMS[1]             # 96
D3 = _pad8(N * MLP_DIMS[2])      # 32  (30 padded)
D4 = _pad8(H1)                   # 104 (100 padded)
D5 = _pad8(H2)                   # 56  (50 padded)
D6 = H3                          # 1

_ROWS = [IN_PAD, D1, D2, D3, D4, D5]   # per-layer K (slab row counts)
_COLS = [D1, D2, D3, D4, D5, D6]       # per-layer N
_ROW_OFF = [0]
for _r in _ROWS[:-1]:
    _ROW_OFF.append(_ROW_OFF[-1] + _r)
W_SLAB_ROWS = sum(_ROWS)               # 528
SLAB_COLS = max(_COLS)                 # 192
N_LAYERS = 6

TB = 128   # batch tile (tune up to 512-2048; budget VMEM on v7x's 64 MiB)


# ------------------------------- kernel -------------------------------------
def value_kernel(x_ref, w_ref, b_ref, out_ref):
    """x_ref: (TB, IN_PAD); w_ref: (528, 192); b_ref: (8, 192); out: (TB, 1)."""
    f32 = jnp.float32
    h = x_ref[...]                                       # (TB, 48)
    for li in range(N_LAYERS):                           # static unroll (6 layers)
        r0, k, n = _ROW_OFF[li], _ROWS[li], _COLS[li]
        w = w_ref[r0:r0 + k, 0:n]                        # (k, n) static slice
        b = b_ref[li:li + 1, 0:n]                        # (1, n)
        h = jnp.dot(h, w, preferred_element_type=f32) + b
        if li < N_LAYERS - 1:
            h = jnp.tanh(h)
    out_ref[...] = h                                     # (TB, 1)


# --------------------------- parameter handling ------------------------------
def init_params(key):
    """PyTorch-default-style uniform(-1/sqrt(fan_in)) init; W stored as (fin, fout)."""
    layer_dims = [
        (INPUT_DIM, MLP_DIMS[0]),
        (MLP_DIMS[0], MLP_DIMS[1]),
        (MLP_DIMS[1], MLP_DIMS[2]),
        (N * MLP_DIMS[2], H1),   # Linear(30, 100)
        (H1, H2),                # Linear(100, 50)
        (H2, H3),                # Linear(50, 1)
    ]
    params = []
    for fin, fout in layer_dims:
        key, kw, kb = jax.random.split(key, 3)
        bound = 1.0 / (fin ** 0.5)
        w = jax.random.uniform(kw, (fin, fout), jnp.float32, -bound, bound)
        b = jax.random.uniform(kb, (fout,), jnp.float32, -bound, bound)
        params += [w, b]
    return tuple(params)


def _block_diag(w, n):
    """Block-diagonal with n copies of w (fin, fout) -> (n*fin, n*fout)."""
    fin, fout = w.shape
    out = jnp.zeros((n * fin, n * fout), w.dtype)
    for i in range(n):
        out = out.at[i * fin:(i + 1) * fin, i * fout:(i + 1) * fout].set(w)
    return out


def pack_params(params):
    """One-time packing: block-diag per-row layers, zero-pad, concat into 2 slabs."""
    w1, b1, w2, b2, w3, b3, w4, b4, w5, b5, w6, b6 = params

    w_layers = [_block_diag(w1, N), _block_diag(w2, N), _block_diag(w3, N),
                w4, w5, w6]
    b_layers = [jnp.tile(b1, N), jnp.tile(b2, N), jnp.tile(b3, N), b4, b5, b6]

    def pad_w(w, rows, cols):
        return jnp.pad(w, ((0, rows - w.shape[0]), (0, cols - w.shape[1])))

    def pad_b(b, cols):
        return jnp.pad(b, (0, cols - b.shape[0]))[None, :]

    w_slab = jnp.concatenate(
        [pad_w(w, _ROWS[i], SLAB_COLS) for i, w in enumerate(w_layers)], axis=0)
    b_slab = jnp.concatenate(
        [pad_b(b, SLAB_COLS) for b in b_layers]
        + [jnp.zeros((2, SLAB_COLS), jnp.float32)], axis=0)      # pad rows to 8
    return (w_slab.astype(jnp.float32), b_slab.astype(jnp.float32))


# ------------------------------- wrappers ------------------------------------
@jax.jit
def value_network_forward_batched(states, w_slab, b_slab):
    """states: (B, N, INPUT_DIM) (or (B, N*INPUT_DIM)) -> values: (B,)."""
    B = states.shape[0]
    x = states.reshape(B, -1).astype(jnp.float32)
    assert x.shape[1] == IN_FLAT, x.shape
    pad_b = (-B) % TB
    x = jnp.pad(x, ((0, pad_b), (0, IN_PAD - IN_FLAT)))          # (Bp, 48)
    Bp = B + pad_b

    out = pl.pallas_call(
        value_kernel,
        out_shape=jax.ShapeDtypeStruct((Bp, 1), jnp.float32),
        grid=(Bp // TB,),
        in_specs=[
            pl.BlockSpec((TB, IN_PAD), lambda i: (i, 0)),        # state tile
            pl.BlockSpec((W_SLAB_ROWS, SLAB_COLS), lambda i: (0, 0)),  # resident
            pl.BlockSpec((8, SLAB_COLS), lambda i: (0, 0)),            # resident
        ],
        out_specs=pl.BlockSpec((TB, 1), lambda i: (i, 0)),
        compiler_params=pltpu.CompilerParams(
            dimension_semantics=("parallel",)),
    )(x, w_slab, b_slab)
    return out[:B, 0]


def value_network_forward(state, w_slab, b_slab):
    """Single-state forward matching the PyTorch module: (N, INPUT_DIM) -> (1,)."""
    return value_network_forward_batched(state[None], w_slab, b_slab)


def reference_forward(state, params):
    """Pure-JAX reference mirroring the PyTorch module exactly (single state)."""
    w1, b1, w2, b2, w3, b3, w4, b4, w5, b5, w6, b6 = params
    h = jnp.tanh(state @ w1 + b1)
    h = jnp.tanh(h @ w2 + b2)
    h = jnp.tanh(h @ w3 + b3)
    flat = h.reshape(-1)                 # Flatten(0, -1)
    h = jnp.tanh(flat @ w4 + b4)
    h = jnp.tanh(h @ w5 + b5)
    return h @ w6 + b6                   # shape (1,)


# --------------------------------- main --------------------------------------
if __name__ == "__main__":
    key = jax.random.PRNGKey(0)
    kx, kp = jax.random.split(key)

    B = 512
    states = jax.random.normal(kx, (B, N, INPUT_DIM), dtype=jnp.float32)
    params = init_params(kp)
    w_slab, b_slab = pack_params(params)          # one-time packing

    # Batched kernel vs. vmapped pure-JAX reference.
    values = jax.block_until_ready(
        value_network_forward_batched(states, w_slab, b_slab))
    ref = jax.vmap(reference_forward, in_axes=(0, None))(states, params)[:, 0]

    assert values.shape == (B,), values.shape
    assert jnp.allclose(values, ref, atol=1e-4, rtol=1e-4), \
        float(jnp.max(jnp.abs(values - ref)))

    # Single-state path: same signature / semantics as the PyTorch forward.
    v1 = jax.block_until_ready(value_network_forward(states[0], w_slab, b_slab))
    r1 = reference_forward(states[0], params)
    assert v1.shape == (1,), v1.shape
    assert jnp.allclose(v1, r1, atol=1e-4, rtol=1e-4), (v1, r1)

    print("KERNEL_OK")
</pallas_src>

<mosaic_0001>
module attributes {stable_mosaic.version = 11 : i64} {
  func.func @value_kernel(%arg0: i32, %arg1: memref<128x48xf32, #tpu.memory_space<vmem>>, %arg2: memref<528x192xf32, #tpu.memory_space<vmem>>, %arg3: memref<8x192xf32, #tpu.memory_space<vmem>>, %arg4: memref<128x1xf32, #tpu.memory_space<vmem>>) attributes {dimension_semantics = [#tpu.dimension_semantics<parallel>], iteration_bounds = array<i64: 4>, scalar_prefetch = 0 : i64, scratch_operands = 0 : i64, tpu.core_type = #tpu.core_type<tc>, window_params = [{transform_indices = @transform_0, window_bounds = array<i64: 128, 48>}, {pipeline_mode = #tpu.pipeline_mode<synchronous>, transform_indices = @transform_1, window_bounds = array<i64: 528, 192>}, {pipeline_mode = #tpu.pipeline_mode<synchronous>, transform_indices = @transform_2, window_bounds = array<i64: 8, 192>}, {transform_indices = @transform_3, window_bounds = array<i64: 128, 1>}]} {
    %c0 = arith.constant 0 : index
    %c0_0 = arith.constant 0 : index
    %0 = vector.load %arg1[%c0, %c0_0] : memref<128x48xf32, #tpu.memory_space<vmem>>, vector<128x48xf32>
    %c0_1 = arith.constant 0 : index
    %c0_2 = arith.constant 0 : index
    %1 = vector.load %arg2[%c0_1, %c0_2] : memref<528x192xf32, #tpu.memory_space<vmem>>, vector<48x192xf32>
    %c0_3 = arith.constant 0 : index
    %c0_4 = arith.constant 0 : index
    %2 = vector.load %arg3[%c0_3, %c0_4] : memref<8x192xf32, #tpu.memory_space<vmem>>, vector<1x192xf32>
    %cst = arith.constant dense<0.000000e+00> : vector<128x192xf32>
    %3 = tpu.matmul %0, %1, %cst {dimension_numbers = #tpu.dot_dimension_numbers<[1], [0], [0], [1], [0, 0, 1, 1], [], []>} : vector<128x48xf32>, vector<48x192xf32>, vector<128x192xf32> -> vector<128x192xf32>
    %4 = vector.broadcast %2 : vector<1x192xf32> to vector<128x192xf32>
    %5 = arith.addf %3, %4 : vector<128x192xf32>
    %6 = math.tanh %5 : vector<128x192xf32>
    %c48 = arith.constant 48 : index
    %c0_5 = arith.constant 0 : index
    %7 = vector.load %arg2[%c48, %c0_5] : memref<528x192xf32, #tpu.memory_space<vmem>>, vector<192x96xf32>
    %c1 = arith.constant 1 : index
    %c0_6 = arith.constant 0 : index
    %8 = vector.load %arg3[%c1, %c0_6] : memref<8x192xf32, #tpu.memory_space<vmem>>, vector<1x96xf32>
    %cst_7 = arith.constant dense<0.000000e+00> : vector<128x96xf32>
    %9 = tpu.matmul %6, %7, %cst_7 {dimension_numbers = #tpu.dot_dimension_numbers<[1], [0], [0], [1], [0, 0, 1, 1], [], []>} : vector<128x192xf32>, vector<192x96xf32>, vector<128x96xf32> -> vector<128x96xf32>
    %10 = vector.broadcast %8 : vector<1x96xf32> to vector<128x96xf32>
    %11 = arith.addf %9, %10 : vector<128x96xf32>
    %12 = math.tanh %11 : vector<128x96xf32>
    %c240 = arith.constant 240 : index
    %c0_8 = arith.constant 0 : index
    %13 = vector.load %arg2[%c240, %c0_8] : memref<528x192xf32, #tpu.memory_space<vmem>>, vector<96x32xf32>
    %c2 = arith.constant 2 : index
    %c0_9 = arith.constant 0 : index
    %14 = vector.load %arg3[%c2, %c0_9] : memref<8x192xf32, #tpu.memory_space<vmem>>, vector<1x32xf32>
    %cst_10 = arith.constant dense<0.000000e+00> : vector<128x32xf32>
    %15 = tpu.matmul %12, %13, %cst_10 {dimension_numbers = #tpu.dot_dimension_numbers<[1], [0], [0], [1], [0, 0, 1, 1], [], []>} : vector<128x96xf32>, vector<96x32xf32>, vector<128x32xf32> -> vector<128x32xf32>
    %16 = vector.broadcast %14 : vector<1x32xf32> to vector<128x32xf32>
    %17 = arith.addf %15, %16 : vector<128x32xf32>
    %18 = math.tanh %17 : vector<128x32xf32>
    %c336 = arith.constant 336 : index
    %c0_11 = arith.constant 0 : index
    %19 = vector.load %arg2[%c336, %c0_11] : memref<528x192xf32, #tpu.memory_space<vmem>>, vector<32x104xf32>
    %c3 = arith.constant 3 : index
    %c0_12 = arith.constant 0 : index
    %20 = vector.load %arg3[%c3, %c0_12] : memref<8x192xf32, #tpu.memory_space<vmem>>, vector<1x104xf32>
    %cst_13 = arith.constant dense<0.000000e+00> : vector<128x104xf32>
    %21 = tpu.matmul %18, %19, %cst_13 {dimension_numbers = #tpu.dot_dimension_numbers<[1], [0], [0], [1], [0, 0, 1, 1], [], []>} : vector<128x32xf32>, vector<32x104xf32>, vector<128x104xf32> -> vector<128x104xf32>
    %22 = vector.broadcast %20 : vector<1x104xf32> to vector<128x104xf32>
    %23 = arith.addf %21, %22 : vector<128x104xf32>
    %24 = math.tanh %23 : vector<128x104xf32>
    %c368 = arith.constant 368 : index
    %c0_14 = arith.constant 0 : index
    %25 = vector.load %arg2[%c368, %c0_14] : memref<528x192xf32, #tpu.memory_space<vmem>>, vector<104x56xf32>
    %c4 = arith.constant 4 : index
    %c0_15 = arith.constant 0 : index
    %26 = vector.load %arg3[%c4, %c0_15] : memref<8x192xf32, #tpu.memory_space<vmem>>, vector<1x56xf32>
    %cst_16 = arith.constant dense<0.000000e+00> : vector<128x56xf32>
    %27 = tpu.matmul %24, %25, %cst_16 {dimension_numbers = #tpu.dot_dimension_numbers<[1], [0], [0], [1], [0, 0, 1, 1], [], []>} : vector<128x104xf32>, vector<104x56xf32>, vector<128x56xf32> -> vector<128x56xf32>
    %28 = vector.broadcast %26 : vector<1x56xf32> to vector<128x56xf32>
    %29 = arith.addf %27, %28 : vector<128x56xf32>
    %30 = math.tanh %29 : vector<128x56xf32>
    %c472 = arith.constant 472 : index
    %c0_17 = arith.constant 0 : index
    %31 = vector.load %arg2[%c472, %c0_17] : memref<528x192xf32, #tpu.memory_space<vmem>>, vector<56x1xf32>
    %c5 = arith.constant 5 : index
    %c0_18 = arith.constant 0 : index
    %32 = vector.load %arg3[%c5, %c0_18] : memref<8x192xf32, #tpu.memory_space<vmem>>, vector<1x1xf32>
    %cst_19 = arith.constant dense<0.000000e+00> : vector<128x1xf32>
    %33 = tpu.matmul %30, %31, %cst_19 {dimension_numbers = #tpu.dot_dimension_numbers<[1], [0], [0], [1], [0, 0, 1, 1], [], []>} : vector<128x56xf32>, vector<56x1xf32>, vector<128x1xf32> -> vector<128x1xf32>
    %34 = vector.broadcast %32 : vector<1x1xf32> to vector<128x1xf32>
    %35 = arith.addf %33, %34 : vector<128x1xf32>
    %c0_20 = arith.constant 0 : index
    %c0_21 = arith.constant 0 : index
    %36 = vector.load %arg4[%c0_20, %c0_21] : memref<128x1xf32, #tpu.memory_space<vmem>>, vector<128x1xf32>
    tpu.vector_store %arg4[%c0_20, %c0_21], %35 {strides = array<i32>} : memref<128x1xf32, #tpu.memory_space<vmem>>, vector<128x1xf32>,
    return
  }
  func.func @transform_0(%arg0: i32) -> (i32, i32) {
    %c0_i32 = arith.constant 0 : i32
    %c0_i32_0 = arith.constant 0 : i32
    return %arg0, %c0_i32 : i32, i32
  }
  func.func @transform_1(%arg0: i32) -> (i32, i32) {
    %c0_i32 = arith.constant 0 : i32
    %c0_i32_0 = arith.constant 0 : i32
    %c0_i32_1 = arith.constant 0 : i32
    return %c0_i32, %c0_i32_0 : i32, i32
  }
  func.func @transform_2(%arg0: i32) -> (i32, i32) {
    %c0_i32 = arith.constant 0 : i32
    %c0_i32_0 = arith.constant 0 : i32
    %c0_i32_1 = arith.constant 0 : i32
    return %c0_i32, %c0_i32_0 : i32, i32
  }
  func.func @transform_3(%arg0: i32) -> (i32, i32) {
    %c0_i32 = arith.constant 0 : i32
    %c0_i32_0 = arith.constant 0 : i32
    return %arg0, %c0_i32 : i32, i32
  }
}

</mosaic_0001>

<llo_original>
// kernel: value_network_forward_batched.1
$region0: #{value_network_forward_batched.1}
  #allocation0 [shape = 'u32[]', space=smem, size = 0x4, offset = 0x4, fixed_abs, tag = 'smem constant byte address 0x4 - core index']
  #allocation1 [shape = 'u32[144,128]{1,0:T(1,128)}', space=vmem, size = 0x12000, scoped, tag = 'internal scratch']
  %s0 = inlined_call_operand.vmem [shape: f32[512,48], index: 0, kind: input, shape index: {}]
  %s1 = inlined_call_operand.vmem [shape: f32[528,192], index: 1, kind: input, shape index: {}]
  %s2 = inlined_call_operand.vmem [shape: f32[8,192], index: 2, kind: input, shape index: {}]
  %s3 = inlined_call_operand.vmem [shape: f32[512,1], index: 3, kind: output, shape index: {}]
  %s4 = sld [smem:[#allocation0]]
  $region45: #{value_network_forward_batched.1} parent=0
    _
  %s6 = ssub.s32 1, %s4
  %s7 = scalar_select 0, %s6, %s4
  loop: start=0, step=1, limit=6
  $region2: #{value_network_forward_batched.1} parent=0 // loop_pre_header
    _
  $region3: #{value_network_forward_batched.1} parent=0 // loop_header
    %s9 = sphi 0, %s13
    %p10 = scmp.ge.s32.totalorder %s9, 6
    %s19 = sphi 0, %s21
    %s22 = sphi 0, %s19
    %s23 = sphi 0, %s22
    %s39 = sphi 0, %s23
    %s43 = sphi 0, %s43
    %s45 = sphi 0, %s43
    %s46 = sphi 0, %s45
    %s60 = sphi 0, %s46
    %s64 = sphi 0, %s64
    %s66 = sphi 0, %s64
    %s67 = sphi 0, %s66
    %s81 = sphi 0, %s67
    %s87 = sphi 0, %s89
    %s90 = sphi 0, %s87
    %s91 = sphi 0, %s90
    %s107 = sphi 0, %s91
  $region4: #{value_network_forward_batched.1} parent=0 // loop_header_branch
    %12 = sbr.rel (%p10) target = $region8
  $region5: #{value_network_forward_batched.1} parent=0 // loop_body
    %s14 = ssub.s32 %s9, 1
    %s15 = ssub.s32 %s9, 2
    %s16 = sadd.s32 %s9, 1
    %s17 = ssub.s32 %s9, %s16
    %p18 = scmp.eq.s32.totalorder %s17, 0
    %s20 = sadd.s32 %s19, 1
    %s21 = scalar_select %p18, %s19, %s20
    %p24 = pneg %p18
    %p25 = scmp.eq.s32.totalorder %s9, 3
    %p26 = por %p24, %p25
    %p27 = scmp.ne.s32.totalorder %s19, %s22
    %p28 = scmp.eq.s32.totalorder %s9, 0
    %p29 = por %p27, %p28
    %p30 = scmp.ne.s32.totalorder %s19, %s22
    %p31 = scmp.eq.s32.totalorder %s14, 3
    %p32 = por %p30, %p31
    %p33 = scmp.ne.s32.totalorder %s22, %s23
    %p34 = scmp.eq.s32.totalorder %s14, 0
    %p35 = por %p33, %p34
    %p36 = scmp.ne.s32.totalorder %s22, %s23
    %p37 = scmp.eq.s32.totalorder %s15, 3
    %p38 = por %p36, %p37
    %p40 = scmp.ne.s32.totalorder %s23, %s39
    %p41 = scmp.eq.s32.totalorder %s15, 0
    %p42 = por %p40, %p41
    %s44 = sadd.s32 %s43, 1
    %p47 = scmp.eq.s32.totalorder %s9, 3
    %p48 = scmp.ne.s32.totalorder %s43, %s45
    %p49 = scmp.eq.s32.totalorder %s9, 0
    %p50 = por %p48, %p49
    %p51 = scmp.ne.s32.totalorder %s43, %s45
    %p52 = scmp.eq.s32.totalorder %s14, 3
    %p53 = por %p51, %p52
    %p54 = scmp.ne.s32.totalorder %s45, %s46
    %p55 = scmp.eq.s32.totalorder %s14, 0
    %p56 = por %p54, %p55
    %p57 = scmp.ne.s32.totalorder %s45, %s46
    %p58 = scmp.eq.s32.totalorder %s15, 3
    %p59 = por %p57, %p58
    %p61 = scmp.ne.s32.totalorder %s46, %s60
    %p62 = scmp.eq.s32.totalorder %s15, 0
    %p63 = por %p61, %p62
    %s65 = sadd.s32 %s64, 1
    %p68 = scmp.eq.s32.totalorder %s9, 3
    %p69 = scmp.ne.s32.totalorder %s64, %s66
    %p70 = scmp.eq.s32.totalorder %s9, 0
    %p71 = por %p69, %p70
    %p72 = scmp.ne.s32.totalorder %s64, %s66
    %p73 = scmp.eq.s32.totalorder %s14, 3
    %p74 = por %p72, %p73
    %p75 = scmp.ne.s32.totalorder %s66, %s67
    %p76 = scmp.eq.s32.totalorder %s14, 0
    %p77 = por %p75, %p76
    %p78 = scmp.ne.s32.totalorder %s66, %s67
    %p79 = scmp.eq.s32.totalorder %s15, 3
    %p80 = por %p78, %p79
    %p82 = scmp.ne.s32.totalorder %s67, %s81
    %p83 = scmp.eq.s32.totalorder %s15, 0
    %p84 = por %p82, %p83
    %s85 = ssub.s32 %s9, %s16
    %p86 = scmp.eq.s32.totalorder %s85, 0
    %s88 = sadd.s32 %s87, 1
    %s89 = scalar_select %p86, %s87, %s88
    %p92 = pneg %p86
    %p93 = scmp.eq.s32.totalorder %s9, 3
    %p94 = por %p92, %p93
    %p95 = scmp.ne.s32.totalorder %s87, %s90
    %p96 = scmp.eq.s32.totalorder %s9, 0
    %p97 = por %p95, %p96
    %p98 = scmp.ne.s32.totalorder %s87, %s90
    %p99 = scmp.eq.s32.totalorder %s14, 3
    %p100 = por %p98, %p99
    %p101 = scmp.ne.s32.totalorder %s90, %s91
    %p102 = scmp.eq.s32.totalorder %s14, 0
    %p103 = por %p101, %p102
    %p104 = scmp.ne.s32.totalorder %s90, %s91
    %p105 = scmp.eq.s32.totalorder %s15, 3
    %p106 = por %p104, %p105
    %p108 = scmp.ne.s32.totalorder %s91, %s107
    %p109 = scmp.eq.s32.totalorder %s15, 0
    %p110 = por %p108, %p109
    %p111 = scmp.le.s32.totalorder 1, %s9
    %p112 = scmp.lt.s32.totalorder %s9, 5
    %p113 = pnand %p111, %p112
    %p114 = pneg %p113
    // Predicated region
    $region9: #{value_network_forward_batched.1} parent=5 // pred_check
      _
    $region10: #{value_network_forward_batched.1} parent=5 // pred_check_branch
      %116 = sbr.rel (%p113) target = $region12
    $region11: #{value_network_forward_batched.1} parent=5 // pred_region
      %s117 = ssub.s32 %s9, 1
      // Predicated region
      $region13: #{value_network_forward_batched.1} parent=11 // pred_check
        %p118 = pneg %p56
      $region14: #{value_network_forward_batched.1} parent=11 // pred_check_branch
        %120 = sbr.rel (%p118) target = $region16
      $region15: #{value_network_forward_batched.1} parent=11 // pred_region
        _
      $region16: #{value_network_forward_batched.1} parent=11 // pred_fallthru
        _
      // Predicated region
      $region17: #{value_network_forward_batched.1} parent=11 // pred_check
        %p121 = pneg %p77
      $region18: #{value_network_forward_batched.1} parent=11 // pred_check_branch
        %123 = sbr.rel (%p121) target = $region20
      $region19: #{value_network_forward_batched.1} parent=11 // pred_region
        _
      $region20: #{value_network_forward_batched.1} parent=11 // pred_fallthru
        _
    $region12: #{value_network_forward_batched.1} parent=5 // pred_fallthru
      _
    %p124 = scmp.lt.s32.totalorder %s9, 4
    // Predicated region
    $region21: #{value_network_forward_batched.1} parent=5 // pred_check
      %p125 = pneg %p124
    $region22: #{value_network_forward_batched.1} parent=5 // pred_check_branch
      %127 = sbr.rel (%p125) target = $region24
    $region23: #{value_network_forward_batched.1} parent=5 // pred_region
      // Predicated region
      $region25: #{value_network_forward_batched.1} parent=23 // pred_check
        %p128 = pneg %p29
      $region26: #{value_network_forward_batched.1} parent=23 // pred_check_branch
        %130 = sbr.rel (%p128) target = $region28
      $region27: #{value_network_forward_batched.1} parent=23 // pred_region
        %s131 = smul.u32 16, %s9
        %p132 = scmp.lt.s32.totalorder %s131, 63
        %s133 = scalar_select %p132, %s131, 63
        %s134 = smul.addr %s133, 8
        %s135 = scalar_lea.vmem %s0, %s134
        %s136 = smul.u32 16, %s9
      $region28: #{value_network_forward_batched.1} parent=23 // pred_fallthru
        _
    $region24: #{value_network_forward_batched.1} parent=5 // pred_fallthru
      _
    %p137 = scmp.le.s32.totalorder 1, %s9
    %p138 = scmp.lt.s32.totalorder %s9, 5
    %p139 = pnand %p137, %p138
    %p140 = pneg %p139
    // Predicated region
    $region29: #{value_network_forward_batched.1} parent=5 // pred_check
      _
    $region30: #{value_network_forward_batched.1} parent=5 // pred_check_branch
      %142 = sbr.rel (%p139) target = $region32
    $region31: #{value_network_forward_batched.1} parent=5 // pred_region
      %s143 = ssub.s32 %s9, 1
      %s144 = smul.u32 16, %s14
      %p145 = scmp.lt.s32.totalorder %s144, 63
      %s146 = scalar_select %p145, %s144, 63
      %s147 = smul.addr %s146, 8
      %s148 = scalar_lea.vmem %s0, %s147
      %p149 = pneg %p35
      %p150 = pneg %p32
      %p151 = pneg %p56
      %p152 = pneg %p53
      %p153 = pneg %p77
      %p154 = pneg %p74
      %p155 = pneg %p103
      %p156 = pneg %p100
      %s157 = smul.u32 16, %s14
      %p158 = scmp.lt.s32.totalorder %s157, 63
      %s159 = scalar_select %p158, %s157, 63
      %s160 = smul.addr %s159, 8
      %s161 = scalar_lea.vmem %s3, %s160
      %s162 = smul.u32 16, %s14
      %p163 = scmp.lt.s32.totalorder %s162, 63
      %s164 = scalar_select %p163, %s162, 63
      %s165 = smul.addr %s164, 8
      %s166 = scalar_lea.vmem %s0, %s165
      %s167 = smul.u32 16, %s14
      %s168 = smul.u32 16, %s14
      %p169 = scmp.lt.s32.totalorder %s168, 63
      %s170 = scalar_select %p169, %s168, 63
      %s171 = smul.addr %s170, 8
      %s172 = scalar_lea.vmem %s3, %s171
      %s173 = smul.u32 16, %s14
      %v174 = vld [vmem:[%s166] sm:$0xff]
      %v175 = vld [vmem:[%s166 + $0x8] sm:$0xff]
      %v176 = vld [vmem:[%s166 + $0x10] sm:$0xff]
      %v177 = vld [vmem:[%s166 + $0x18] sm:$0xff]
      %v178 = vld [vmem:[%s166 + $0x20] sm:$0xff]
      %v179 = vld [vmem:[%s166 + $0x28] sm:$0xff]
      %v180 = vld [vmem:[%s166 + $0x30] sm:$0xff]
      %v181 = vld [vmem:[%s166 + $0x38] sm:$0xff]
      %v182 = vld [vmem:[%s166 + $0x40] sm:$0xff]
      %v183 = vld [vmem:[%s166 + $0x48] sm:$0xff]
      %v184 = vld [vmem:[%s166 + $0x50] sm:$0xff]
      %v185 = vld [vmem:[%s166 + $0x58] sm:$0xff]
      %v186 = vld [vmem:[%s166 + $0x60] sm:$0xff]
      %v187 = vld [vmem:[%s166 + $0x68] sm:$0xff]
      %v188 = vld [vmem:[%s166 + $0x70] sm:$0xff]
      %v189 = vld [vmem:[%s166 + $0x78] sm:$0xff]
      %v190 = vld [vmem:[%s1] sm:$0xff]
      %v191 = vld [vmem:[%s1 + $0x8] sm:$0xff]
      %v192 = vld [vmem:[%s1 + $0x10] sm:$0xff]
      %v193 = vld [vmem:[%s1 + $0x18] sm:$0xff]
      %v194 = vld [vmem:[%s1 + $0x20] sm:$0xff]
      %v195 = vld [vmem:[%s1 + $0x28] sm:$0xff]
      %v196 = vld [vmem:[%s1 + $0x30] sm:$0xff]
      %v197 = vld [vmem:[%s1 + $0x38] sm:$0xff]
      %v198 = vld [vmem:[%s1 + $0x40] sm:$0xff]
      %v199 = vld [vmem:[%s1 + $0x48] sm:$0xff]
      %v200 = vld [vmem:[%s1 + $0x50] sm:$0xff]
      %v201 = vld [vmem:[%s1 + $0x58] sm:$0xff]
      %v202 = vld [vmem:[%s2] ss:$8 sm:$0x3]
      %v204 = vlaneseq
      %v205 = vshrl.u32 %v204, 7
      %v206 = vsub.s32 0, %v205
      %v207 = vrot.slane %v202, %v206
      %v208 = vlaneseq
      %v209 = vshrl.u32 %v208, 7
      %v210 = vsub.s32 1, %v209
      %v211 = vrot.slane %v202, %v210
      %vm214 = vcmask 392192
      %v216 = vsel %vm214, %v174, 0
      %v219 = vsel %vm214, %v175, 0
      %v222 = vsel %vm214, %v176, 0
      %v225 = vsel %vm214, %v177, 0
      %v228 = vsel %vm214, %v178, 0
      %v231 = vsel %vm214, %v179, 0
      %v234 = vsel %vm214, %v180, 0
      %v237 = vsel %vm214, %v181, 0
      %v240 = vsel %vm214, %v182, 0
      %v243 = vsel %vm214, %v183, 0
      %v246 = vsel %vm214, %v184, 0
      %v249 = vsel %vm214, %v185, 0
      %v252 = vsel %vm214, %v186, 0
      %v255 = vsel %vm214, %v187, 0
      %v258 = vsel %vm214, %v188, 0
      %v261 = vsel %vm214, %v189, 0
      %263 = vmatprep.subr.mxu0 %v191
      %264 = vmatpush1.msra.mxu0 %v190
      %265 = vmatprep.subr.mxu0 %v193
      %266 = vmatpush1.msra.mxu0 %v192
      %267 = vmatprep.subr.mxu0 %v195
      %268 = vmatpush1.msra.mxu0 %v194
      %269 = vmatprep.subr.mxu0 %v197
      %270 = vmatpush1.msra.mxu0 %v196
      %271 = vmatprep.subr.mxu0 %v199
      %272 = vmatpush1.msra.mxu0 %v198
      %273 = vmatprep.subr.mxu0 %v201
      %274 = vmatpush1.msra.mxu0 %v200
      %275 = vmatprep.subr.mxu0 0.0
      %276 = vmatpush1.msra.mxu0 0.0
      %277 = vmatprep.subr.mxu0 0.0
      %278 = vmatpush1.msra.mxu0 0.0
      %279 = vmatprep.subr.mxu0 0.0
      %280 = vmatpush1.msra.mxu0 0.0
      %281 = vmatprep.subr.mxu0 0.0
      %282 = vmatpush1.msra.mxu0 0.0
      %283 = vmatprep.subr.mxu0 0.0
      %284 = vmatpush1.msra.mxu0 0.0
      %285 = vmatprep.subr.mxu0 0.0
      %286 = vmatpush1.msra.mxu0 0.0
      %287 = vmatprep.subr.mxu0 0.0
      %288 = vmatpush1.msra.mxu0 0.0
      %289 = vmatprep.subr.mxu0 0.0
      %290 = vmatpush1.msra.mxu0 0.0
      %291 = vmatprep.subr.mxu0 0.0
      %292 = vmatpush1.msra.mxu0 0.0
      %293 = vmatprep.subr.mxu0 0.0
      %294 = vmatpush1.msra.mxu0 0.0
      %295 = vmatprep.subr.mxu0 0.0
      %296 = vmatpush1.msra.mxu0 0.0
      %297 = vmatprep.subr.mxu0 0.0
      %298 = vmatpush1.msra.mxu0 0.0
      %299 = vmatprep.subr.mxu0 0.0
      %300 = vmatpush1.msra.mxu0 0.0
      %301 = vmatprep.subr.mxu0 0.0
      %302 = vmatpush1.msra.mxu0 0.0
      %303 = vmatprep.subr.mxu0 0.0
      %304 = vmatpush1.msra.mxu0 0.0
      %305 = vmatprep.subr.mxu0 0.0
      %306 = vmatpush1.msra.mxu0 0.0
      %307 = vmatprep.subr.mxu0 0.0
      %308 = vmatpush1.msra.mxu0 0.0
      %309 = vmatprep.subr.mxu0 0.0
      %310 = vmatpush1.msra.mxu0 0.0
      %311 = vmatprep.subr.mxu0 0.0
      %312 = vmatpush1.msra.mxu0 0.0
      %313 = vmatprep.subr.mxu0 0.0
      %314 = vmatpush1.msra.mxu0 0.0
      %315 = vmatprep.subr.mxu0 0.0
      %316 = vmatpush1.msra.mxu0 0.0
      %317 = vmatprep.subr.mxu0 0.0
      %318 = vmatpush1.msra.mxu0 0.0
      %319 = vmatprep.subr.mxu0 0.0
      %320 = vmatpush1.msra.mxu0 0.0
      %321 = vmatprep.subr.mxu0 0.0
      %322 = vmatpush1.msra.mxu0 0.0
      %323 = vmatprep.subr.mxu0 0.0
      %324 = vmatpush1.msra.mxu0 0.0
      %325 = vmatprep.subr.mxu0 0.0
      %326 = vmatpush1.msra.mxu0 0.0
      %327 = vmatprep.mubr.f32.mxu0 0.0
      %328 = vmatmul.mubr.f32.gmra.mrb[0].mxu0 %v216
      %v329 = vpop.f32.mrb[0].mxu0
      %v330 = vadd.f32 %v207, %v329
      %v331 = vpop.f32.mrb[0].mxu0
      %v332 = vadd.f32 %v211, %v331
      %333 = vmatprep.mubr.f32.mxu0 0.0
      %334 = vmatmul.mubr.f32.gmra.mrb[0].mxu0 %v219
      %v335 = vpop.f32.mrb[0].mxu0
      %v336 = vadd.f32 %v207, %v335
      %v337 = vpop.f32.mrb[0].mxu0
      %v338 = vadd.f32 %v211, %v337
      %339 = vmatprep.mubr.f32.mxu0 0.0
      %340 = vmatmul.mubr.f32.gmra.mrb[0].mxu0 %v222
      %v341 = vpop.f32.mrb[0].mxu0
      %v342 = vadd.f32 %v207, %v341
      %v343 = vpop.f32.mrb[0].mxu0
      %v344 = vadd.f32 %v211, %v343
      %345 = vmatprep.mubr.f32.mxu0 0.0
      %346 = vmatmul.mubr.f32.gmra.mrb[0].mxu0 %v225
      %v347 = vpop.f32.mrb[0].mxu0
      %v348 = vadd.f32 %v207, %v347
      %v349 = vpop.f32.mrb[0].mxu0
      %v350 = vadd.f32 %v211, %v349
      %351 = vmatprep.mubr.f32.mxu0 0.0
      %352 = vmatmul.mubr.f32.gmra.mrb[0].mxu0 %v228
      %v353 = vpop.f32.mrb[0].mxu0
      %v354 = vadd.f32 %v207, %v353
      %v355 = vpop.f32.mrb[0].mxu0
      %v356 = vadd.f32 %v211, %v355
      %357 = vmatprep.mubr.f32.mxu0 0.0
      %358 = vmatmul.mubr.f32.gmra.mrb[0].mxu0 %v231
      %v359 = vpop.f32.mrb[0].mxu0
      %v360 = vadd.f32 %v207, %v359
      %v361 = vpop.f32.mrb[0].mxu0
      %v362 = vadd.f32 %v211, %v361
      %363 = vmatprep.mubr.f32.mxu0 0.0
      %364 = vmatmul.mubr.f32.gmra.mrb[0].mxu0 %v234
      %v365 = vpop.f32.mrb[0].mxu0
      %v366 = vadd.f32 %v207, %v365
      %v367 = vpop.f32.mrb[0].mxu0
      %v368 = vadd.f32 %v211, %v367
      %369 = vmatprep.mubr.f32.mxu0 0.0
      %370 = vmatmul.mubr.f32.gmra.mrb[0].mxu0 %v237
      %v371 = vpop.f32.mrb[0].mxu0
      %v372 = vadd.f32 %v207, %v371
      %v373 = vpop.f32.mrb[0].mxu0
      %v374 = vadd.f32 %v211, %v373
      %375 = vmatprep.mubr.f32.mxu0 0.0
      %376 = vmatmul.mubr.f32.gmra.mrb[0].mxu0 %v240
      %v377 = vpop.f32.mrb[0].mxu0
      %v378 = vadd.f32 %v207, %v377
      %v379 = vpop.f32.mrb[0].mxu0
      %v380 = vadd.f32 %v211, %v379
      %381 = vmatprep.mubr.f32.mxu0 0.0
      %382 = vmatmul.mubr.f32.gmra.mrb[0].mxu0 %v243
      %v383 = vpop.f32.mrb[0].mxu0
      %v384 = vadd.f32 %v207, %v383
      %v385 = vpop.f32.mrb[0].mxu0
      %v386 = vadd.f32 %v211, %v385
      %387 = vmatprep.mubr.f32.mxu0 0.0
      %388 = vmatmul.mubr.f32.gmra.mrb[0].mxu0 %v246
      %v389 = vpop.f32.mrb[0].mxu0
      %v390 = vadd.f32 %v207, %v389
      %v391 = vpop.f32.mrb[0].mxu0
      %v392 = vadd.f32 %v211, %v391
      %393 = vmatprep.mubr.f32.mxu0 0.0
      %394 = vmatmul.mubr.f32.gmra.mrb[0].mxu0 %v249
      %v395 = vpop.f32.mrb[0].mxu0
      %v396 = vadd.f32 %v207, %v395
      %v397 = vpop.f32.mrb[0].mxu0
      %v398 = vadd.f32 %v211, %v397
      %399 = vmatprep.mubr.f32.mxu0 0.0
      %400 = vmatmul.mubr.f32.gmra.mrb[0].mxu0 %v252
      %v401 = vpop.f32.mrb[0].mxu0
      %v402 = vadd.f32 %v207, %v401
      %v403 = vpop.f32.mrb[0].mxu0
      %v404 = vadd.f32 %v211, %v403
      %405 = vmatprep.mubr.f32.mxu0 0.0
      %406 = vmatmul.mubr.f32.gmra.mrb[0].mxu0 %v255
      %v407 = vpop.f32.mrb[0].mxu0
      %v408 = vadd.f32 %v207, %v407
      %v409 = vpop.f32.mrb[0].mxu0
      %v410 = vadd.f32 %v211, %v409
      %411 = vmatprep.mubr.f32.mxu0 0.0
      %412 = vmatmul.mubr.f32.gmra.mrb[0].mxu0 %v258
      %v413 = vpop.f32.mrb[0].mxu0
      %v414 = vadd.f32 %v207, %v413
      %v415 = vpop.f32.mrb[0].mxu0
      %v416 = vadd.f32 %v211, %v415
      %417 = vmatprep.mubr.f32.mxu0 0.0
      %418 = vmatmul.mubr.f32.gmra.mrb[0].mxu0 %v261
      %v419 = vpop.f32.mrb[0].mxu0
      %v420 = vadd.f32 %v207, %v419
      %v421 = vpop.f32.mrb[0].mxu0
      %v422 = vadd.f32 %v211, %v421
      %423 = vdwg.mxu0
      %v424 = vtanh.pop %v330
      %v425 = vtanh.pop %v332
      %v426 = vtanh.pop %v336
      %v427 = vtanh.pop %v338
      %v428 = vtanh.pop %v342
      %v429 = vtanh.pop %v344
      %v430 = vtanh.pop %v348
      %v431 = vtanh.pop %v350
      %v432 = vtanh.pop %v354
      %v433 = vtanh.pop %v356
      %v434 = vtanh.pop %v360
      %v435 = vtanh.pop %v362
      %v436 = vtanh.pop %v366
      %v437 = vtanh.pop %v368
      %v438 = vtanh.pop %v372
      %v439 = vtanh.pop %v374
      %v440 = vtanh.pop %v378
      %v441 = vtanh.pop %v380
      %v442 = vtanh.pop %v384
      %v443 = vtanh.pop %v386
      %v444 = vtanh.pop %v390
      %v445 = vtanh.pop %v392
      %v446 = vtanh.pop %v396
      %v447 = vtanh.pop %v398
      %v448 = vtanh.pop %v402
      %v449 = vtanh.pop %v404
      %v450 = vtanh.pop %v408
      %v451 = vtanh.pop %v410
      %v452 = vtanh.pop %v414
      %v453 = vtanh.pop %v416
      %v454 = vtanh.pop %v420
      %v455 = vtanh.pop %v422
      %v456 = vld [vmem:[%s1 + $0x60] sm:$0xff]
      %v457 = vld [vmem:[%s1 + $0x70] sm:$0xff]
      %v458 = vld [vmem:[%s1 + $0x80] sm:$0xff]
      %v459 = vld [vmem:[%s1 + $0x90] sm:$0xff]
      %v460 = vld [vmem:[%s1 + $0xa0] sm:$0xff]
      %v461 = vld [vmem:[%s1 + $0xb0] sm:$0xff]
      %v462 = vld [vmem:[%s1 + $0xc0] sm:$0xff]
      %v463 = vld [vmem:[%s1 + $0xd0] sm:$0xff]
      %v464 = vld [vmem:[%s1 + $0xe0] sm:$0xff]
      %v465 = vld [vmem:[%s1 + $0xf0] sm:$0xff]
      %v466 = vld [vmem:[%s1 + $0x100] sm:$0xff]
      %v467 = vld [vmem:[%s1 + $0x110] sm:$0xff]
      %v468 = vld [vmem:[%s1 + $0x120] sm:$0xff]
      %v469 = vld [vmem:[%s1 + $0x130] sm:$0xff]
      %v470 = vld [vmem:[%s1 + $0x140] sm:$0xff]
      %v471 = vld [vmem:[%s1 + $0x150] sm:$0xff]
      %v472 = vld [vmem:[%s1 + $0x160] sm:$0xff]
      %v473 = vld [vmem:[%s1 + $0x170] sm:$0xff]
      %v474 = vld [vmem:[%s1 + $0x180] sm:$0xff]
      %v475 = vld [vmem:[%s1 + $0x190] sm:$0xff]
      %v476 = vld [vmem:[%s1 + $0x1a0] sm:$0xff]
      %v477 = vld [vmem:[%s1 + $0x1b0] sm:$0xff]
      %v478 = vld [vmem:[%s1 + $0x1c0] sm:$0xff]
      %v479 = vld [vmem:[%s1 + $0x1d0] sm:$0xff]
      %v480 = vld [vmem:[%s2 + $0x1] ss:$0 sm:$0xff]
      %vm481 = vcmask 523264
      %v483 = vsel %vm481, %v425, 0
      %v486 = vsel %vm481, %v427, 0
      %v489 = vsel %vm481, %v429, 0
      %v492 = vsel %vm481, %v431, 0
      %v495 = vsel %vm481, %v433, 0
      %v498 = vsel %vm481, %v435, 0
      %v501 = vsel %vm481, %v437, 0
      %v504 = vsel %vm481, %v439, 0
      %v507 = vsel %vm481, %v441, 0
      %v510 = vsel %vm481, %v443, 0
      %v513 = vsel %vm481, %v445, 0
      %v516 = vsel %vm481, %v447, 0
      %v519 = vsel %vm481, %v449, 0
      %v522 = vsel %vm481, %v451, 0
      %v525 = vsel %vm481, %v453, 0
      %v528 = vsel %vm481, %v455, 0
      %530 = vmatprep.subr.mxu0 0.0
      %531 = vmatpush1.msra.mxu0 %v456
      %532 = vmatprep.subr.mxu0 0.0
      %533 = vmatpush1.msra.mxu0 %v457
      %534 = vmatprep.subr.mxu0 0.0
      %535 = vmatpush1.msra.mxu0 %v458
      %536 = vmatprep.subr.mxu0 0.0
      %537 = vmatpush1.msra.mxu0 %v459
      %538 = vmatprep.subr.mxu0 0.0
      %539 = vmatpush1.msra.mxu0 %v460
      %540 = vmatprep.subr.mxu0 0.0
      %541 = vmatpush1.msra.mxu0 %v461
      %542 = vmatprep.subr.mxu0 0.0
      %543 = vmatpush1.msra.mxu0 %v462
      %544 = vmatprep.subr.mxu0 0.0
      %545 = vmatpush1.msra.mxu0 %v463
      %546 = vmatprep.subr.mxu0 0.0
      %547 = vmatpush1.msra.mxu0 %v464
      %548 = vmatprep.subr.mxu0 0.0
      %549 = vmatpush1.msra.mxu0 %v465
      %550 = vmatprep.subr.mxu0 0.0
      %551 = vmatpush1.msra.mxu0 %v466
      %552 = vmatprep.subr.mxu0 0.0
      %553 = vmatpush1.msra.mxu0 %v467
      %554 = vmatprep.subr.mxu0 0.0
      %555 = vmatpush1.msra.mxu0 %v468
      %556 = vmatprep.subr.mxu0 0.0
      %557 = vmatpush1.msra.mxu0 %v469
      %558 = vmatprep.subr.mxu0 0.0
      %559 = vmatpush1.msra.mxu0 %v470
      %560 = vmatprep.subr.mxu0 0.0
      %561 = vmatpush1.msra.mxu0 %v471
      %562 = vmatprep.subr.mxu0 0.0
      %563 = vmatpush1.msra.mxu0 %v472
      %564 = vmatprep.subr.mxu0 0.0
      %565 = vmatpush1.msra.mxu0 %v473
      %566 = vmatprep.subr.mxu0 0.0
      %567 = vmatpush1.msra.mxu0 %v474
      %568 = vmatprep.subr.mxu0 0.0
      %569 = vmatpush1.msra.mxu0 %v475
      %570 = vmatprep.subr.mxu0 0.0
      %571 = vmatpush1.msra.mxu0 %v476
      %572 = vmatprep.subr.mxu0 0.0
      %573 = vmatpush1.msra.mxu0 %v477
      %574 = vmatprep.subr.mxu0 0.0
      %575 = vmatpush1.msra.mxu0 %v478
      %576 = vmatprep.subr.mxu0 0.0
      %577 = vmatpush1.msra.mxu0 %v479
      %578 = vmatprep.subr.mxu0 0.0
      %579 = vmatpush1.msra.mxu0 0.0
      %580 = vmatprep.subr.mxu0 0.0
      %581 = vmatpush1.msra.mxu0 0.0
      %582 = vmatprep.subr.mxu0 0.0
      %583 = vmatpush1.msra.mxu0 0.0
      %584 = vmatprep.subr.mxu0 0.0
      %585 = vmatpush1.msra.mxu0 0.0
      %586 = vmatprep.subr.mxu0 0.0
      %587 = vmatpush1.msra.mxu0 0.0
      %588 = vmatprep.subr.mxu0 0.0
      %589 = vmatpush1.msra.mxu0 0.0
      %590 = vmatprep.subr.mxu0 0.0
      %591 = vmatpush1.msra.mxu0 0.0
      %592 = vmatprep.subr.mxu0 0.0
      %593 = vmatpush1.msra.mxu0 0.0
      %594 = vmatprep.mubr.f32.mxu0 %v483
      %595 = vmatmul.mubr.f32.gmra.mrb[0].mxu0 %v424
      %v596 = vpop.f32.mrb[0].mxu0
      %v597 = vadd.f32 %v480, %v596
      %v598 = vpop.f32.mrb[0].mxu0
      %599 = vmatprep.mubr.f32.mxu0 %v486
      %600 = vmatmul.mubr.f32.gmra.mrb[0].mxu0 %v426
      %v601 = vpop.f32.mrb[0].mxu0
      %v602 = vadd.f32 %v480, %v601
      %v603 = vpop.f32.mrb[0].mxu0
      %604 = vmatprep.mubr.f32.mxu0 %v489
      %605 = vmatmul.mubr.f32.gmra.mrb[0].mxu0 %v428
      %v606 = vpop.f32.mrb[0].mxu0
      %v607 = vadd.f32 %v480, %v606
      %v608 = vpop.f32.mrb[0].mxu0
      %609 = vmatprep.mubr.f32.mxu0 %v492
      %610 = vmatmul.mubr.f32.gmra.mrb[0].mxu0 %v430
      %v611 = vpop.f32.mrb[0].mxu0
      %v612 = vadd.f32 %v480, %v611
      %v613 = vpop.f32.mrb[0].mxu0
      %614 = vmatprep.mubr.f32.mxu0 %v495
      %615 = vmatmul.mubr.f32.gmra.mrb[0].mxu0 %v432
      %v616 = vpop.f32.mrb[0].mxu0
      %v617 = vadd.f32 %v480, %v616
      %v618 = vpop.f32.mrb[0].mxu0
      %619 = vmatprep.mubr.f32.mxu0 %v498
      %620 = vmatmul.mubr.f32.gmra.mrb[0].mxu0 %v434
      %v621 = vpop.f32.mrb[0].mxu0
      %v622 = vadd.f32 %v480, %v621
      %v623 = vpop.f32.mrb[0].mxu0
      %624 = vmatprep.mubr.f32.mxu0 %v501
      %625 = vmatmul.mubr.f32.gmra.mrb[0].mxu0 %v436
      %v626 = vpop.f32.mrb[0].mxu0
      %v627 = vadd.f32 %v480, %v626
      %v628 = vpop.f32.mrb[0].mxu0
      %629 = vmatprep.mubr.f32.mxu0 %v504
      %630 = vmatmul.mubr.f32.gmra.mrb[0].mxu0 %v438
      %v631 = vpop.f32.mrb[0].mxu0
      %v632 = vadd.f32 %v480, %v631
      %v633 = vpop.f32.mrb[0].mxu0
      %634 = vmatprep.mubr.f32.mxu0 %v507
      %635 = vmatmul.mubr.f32.gmra.mrb[0].mxu0 %v440
      %v636 = vpop.f32.mrb[0].mxu0
      %v637 = vadd.f32 %v480, %v636
      %v638 = vpop.f32.mrb[0].mxu0
      %639 = vmatprep.mubr.f32.mxu0 %v510
      %640 = vmatmul.mubr.f32.gmra.mrb[0].mxu0 %v442
      %v641 = vpop.f32.mrb[0].mxu0
      %v642 = vadd.f32 %v480, %v641
      %v643 = vpop.f32.mrb[0].mxu0
      %644 = vmatprep.mubr.f32.mxu0 %v513
      %645 = vmatmul.mubr.f32.gmra.mrb[0].mxu0 %v444
      %v646 = vpop.f32.mrb[0].mxu0
      %v647 = vadd.f32 %v480, %v646
      %v648 = vpop.f32.mrb[0].mxu0
      %649 = vmatprep.mubr.f32.mxu0 %v516
      %650 = vmatmul.mubr.f32.gmra.mrb[0].mxu0 %v446
      %v651 = vpop.f32.mrb[0].mxu0
      %v652 = vadd.f32 %v480, %v651
      %v653 = vpop.f32.mrb[0].mxu0
      %654 = vmatprep.mubr.f32.mxu0 %v519
      %655 = vmatmul.mubr.f32.gmra.mrb[0].mxu0 %v448
      %v656 = vpop.f32.mrb[0].mxu0
      %v657 = vadd.f32 %v480, %v656
      %v658 = vpop.f32.mrb[0].mxu0
      %659 = vmatprep.mubr.f32.mxu0 %v522
      %660 = vmatmul.mubr.f32.gmra.mrb[0].mxu0 %v450
      %v661 = vpop.f32.mrb[0].mxu0
      %v662 = vadd.f32 %v480, %v661
      %v663 = vpop.f32.mrb[0].mxu0
      %664 = vmatprep.mubr.f32.mxu0 %v525
      %665 = vmatmul.mubr.f32.gmra.mrb[0].mxu0 %v452
      %v666 = vpop.f32.mrb[0].mxu0
      %v667 = vadd.f32 %v480, %v666
      %v668 = vpop.f32.mrb[0].mxu0
      %669 = vmatprep.mubr.f32.mxu0 %v528
      %670 = vmatmul.mubr.f32.gmra.mrb[0].mxu0 %v454
      %v671 = vpop.f32.mrb[0].mxu0
      %v672 = vadd.f32 %v480, %v671
      %v673 = vpop.f32.mrb[0].mxu0
      %674 = vdwg.mxu0
      %v675 = vtanh.pop %v597
      %v676 = vtanh.pop %v602
      %v677 = vtanh.pop %v607
      %v678 = vtanh.pop %v612
      %v679 = vtanh.pop %v617
      %v680 = vtanh.pop %v622
      %v681 = vtanh.pop %v627
      %v682 = vtanh.pop %v632
      %v683 = vtanh.pop %v637
      %v684 = vtanh.pop %v642
      %v685 = vtanh.pop %v647
      %v686 = vtanh.pop %v652
      %v687 = vtanh.pop %v657
      %v688 = vtanh.pop %v662
      %v689 = vtanh.pop %v667
      %v690 = vtanh.pop %v672
      %v691 = vld [vmem:[%s1 + $0x1e0] sm:$0xff]
      %v692 = vld [vmem:[%s1 + $0x1f0] sm:$0xff]
      %v693 = vld [vmem:[%s1 + $0x200] sm:$0xff]
      %v694 = vld [vmem:[%s1 + $0x210] sm:$0xff]
      %v695 = vld [vmem:[%s1 + $0x220] sm:$0xff]
      %v696 = vld [vmem:[%s1 + $0x230] sm:$0xff]
      %v697 = vld [vmem:[%s1 + $0x240] sm:$0xff]
      %v698 = vld [vmem:[%s1 + $0x250] sm:$0xff]
      %v699 = vld [vmem:[%s1 + $0x260] sm:$0xff]
      %v700 = vld [vmem:[%s1 + $0x270] sm:$0xff]
      %v701 = vld [vmem:[%s1 + $0x280] sm:$0xff]
      %v702 = vld [vmem:[%s1 + $0x290] sm:$0xff]
      %v703 = vld [vmem:[%s2 + $0x2] ss:$0 sm:$0xff]
      %vm704 = vcmask 785408
      %v706 = vsel %vm704, %v675, 0
      %v709 = vsel %vm704, %v676, 0
      %v712 = vsel %vm704, %v677, 0
      %v715 = vsel %vm704, %v678, 0
      %v718 = vsel %vm704, %v679, 0
      %v721 = vsel %vm704, %v680, 0
      %v724 = vsel %vm704, %v681, 0
      %v727 = vsel %vm704, %v682, 0
      %v730 = vsel %vm704, %v683, 0
      %v733 = vsel %vm704, %v684, 0
      %v736 = vsel %vm704, %v685, 0
      %v739 = vsel %vm704, %v686, 0
      %v742 = vsel %vm704, %v687, 0
      %v745 = vsel %vm704, %v688, 0
      %v748 = vsel %vm704, %v689, 0
      %v751 = vsel %vm704, %v690, 0
      %753 = vmatprep.subr.mxu0 0.0
      %754 = vmatpush1.msra.mxu0 %v691
      %755 = vmatprep.subr.mxu0 0.0
      %756 = vmatpush1.msra.mxu0 %v692
      %757 = vmatprep.subr.mxu0 0.0
      %758 = vmatpush1.msra.mxu0 %v693
      %759 = vmatprep.subr.mxu0 0.0
      %760 = vmatpush1.msra.mxu0 %v694
      %761 = vmatprep.subr.mxu0 0.0
      %762 = vmatpush1.msra.mxu0 %v695
      %763 = vmatprep.subr.mxu0 0.0
      %764 = vmatpush1.msra.mxu0 %v696
      %765 = vmatprep.subr.mxu0 0.0
      %766 = vmatpush1.msra.mxu0 %v697
      %767 = vmatprep.subr.mxu0 0.0
      %768 = vmatpush1.msra.mxu0 %v698
      %769 = vmatprep.subr.mxu0 0.0
      %770 = vmatpush1.msra.mxu0 %v699
      %771 = vmatprep.subr.mxu0 0.0
      %772 = vmatpush1.msra.mxu0 %v700
      %773 = vmatprep.subr.mxu0 0.0
      %774 = vmatpush1.msra.mxu0 %v701
      %775 = vmatprep.subr.mxu0 0.0
      %776 = vmatpush1.msra.mxu0 %v702
      %777 = vmatprep.subr.mxu0 0.0
      %778 = vmatpush1.msra.mxu0 0.0
      %779 = vmatprep.subr.mxu0 0.0
      %780 = vmatpush1.msra.mxu0 0.0
      %781 = vmatprep.subr.mxu0 0.0
      %782 = vmatpush1.msra.mxu0 0.0
      %783 = vmatprep.subr.mxu0 0.0
      %784 = vmatpush1.msra.mxu0 0.0
      %785 = vmatprep.subr.mxu0 0.0
      %786 = vmatpush1.msra.mxu0 0.0
      %787 = vmatprep.subr.mxu0 0.0
      %788 = vmatpush1.msra.mxu0 0.0
      %789 = vmatprep.subr.mxu0 0.0
      %790 = vmatpush1.msra.mxu0 0.0
      %791 = vmatprep.subr.mxu0 0.0
      %792 = vmatpush1.msra.mxu0 0.0
      %793 = vmatprep.subr.mxu0 0.0
      %794 = vmatpush1.msra.mxu0 0.0
      %795 = vmatprep.subr.mxu0 0.0
      %796 = vmatpush1.msra.mxu0 0.0
      %797 = vmatprep.subr.mxu0 0.0
      %798 = vmatpush1.msra.mxu0 0.0
      %799 = vmatprep.subr.mxu0 0.0
      %800 = vmatpush1.msra.mxu0 0.0
      %801 = vmatprep.subr.mxu0 0.0
      %802 = vmatpush1.msra.mxu0 0.0
      %803 = vmatprep.subr.mxu0 0.0
      %804 = vmatpush1.msra.mxu0 0.0
      %805 = vmatprep.subr.mxu0 0.0
      %806 = vmatpush1.msra.mxu0 0.0
      %807 = vmatprep.subr.mxu0 0.0
      %808 = vmatpush1.msra.mxu0 0.0
      %809 = vmatprep.subr.mxu0 0.0
      %810 = vmatpush1.msra.mxu0 0.0
      %811 = vmatprep.subr.mxu0 0.0
      %812 = vmatpush1.msra.mxu0 0.0
      %813 = vmatprep.subr.mxu0 0.0
      %814 = vmatpush1.msra.mxu0 0.0
      %815 = vmatprep.subr.mxu0 0.0
      %816 = vmatpush1.msra.mxu0 0.0
      %817 = vmatprep.mubr.f32.mxu0 0.0
      %818 = vmatmul.mubr.f32.gmra.mrb[0].mxu0 %v706
      %v819 = vpop.f32.mrb[0].mxu0
      %v820 = vadd.f32 %v703, %v819
      %v821 = vpop.f32.mrb[0].mxu0
      %822 = vmatprep.mubr.f32.mxu0 0.0
      %823 = vmatmul.mubr.f32.gmra.mrb[0].mxu0 %v709
      %v824 = vpop.f32.mrb[0].mxu0
      %v825 = vadd.f32 %v703, %v824
      %v826 = vpop.f32.mrb[0].mxu0
      %827 = vmatprep.mubr.f32.mxu0 0.0
      %828 = vmatmul.mubr.f32.gmra.mrb[0].mxu0 %v712
      %v829 = vpop.f32.mrb[0].mxu0
      %v830 = vadd.f32 %v703, %v829
      %v831 = vpop.f32.mrb[0].mxu0
      %832 = vmatprep.mubr.f32.mxu0 0.0
      %833 = vmatmul.mubr.f32.gmra.mrb[0].mxu0 %v715
      %v834 = vpop.f32.mrb[0].mxu0
      %v835 = vadd.f32 %v703, %v834
      %v836 = vpop.f32.mrb[0].mxu0
      %837 = vmatprep.mubr.f32.mxu0 0.0
      %838 = vmatmul.mubr.f32.gmra.mrb[0].mxu0 %v718
      %v839 = vpop.f32.mrb[0].mxu0
      %v840 = vadd.f32 %v703, %v839
      %v841 = vpop.f32.mrb[0].mxu0
      %842 = vmatprep.mubr.f32.mxu0 0.0
      %843 = vmatmul.mubr.f32.gmra.mrb[0].mxu0 %v721
      %v844 = vpop.f32.mrb[0].mxu0
      %v845 = vadd.f32 %v703, %v844
      %v846 = vpop.f32.mrb[0].mxu0
      %847 = vmatprep.mubr.f32.mxu0 0.0
      %848 = vmatmul.mubr.f32.gmra.mrb[0].mxu0 %v724
      %v849 = vpop.f32.mrb[0].mxu0
      %v850 = vadd.f32 %v703, %v849
      %v851 = vpop.f32.mrb[0].mxu0
      %852 = vmatprep.mubr.f32.mxu0 0.0
      %853 = vmatmul.mubr.f32.gmra.mrb[0].mxu0 %v727
      %v854 = vpop.f32.mrb[0].mxu0
      %v855 = vadd.f32 %v703, %v854
      %v856 = vpop.f32.mrb[0].mxu0
      %857 = vmatprep.mubr.f32.mxu0 0.0
      %858 = vmatmul.mubr.f32.gmra.mrb[0].mxu0 %v730
      %v859 = vpop.f32.mrb[0].mxu0
      %v860 = vadd.f32 %v703, %v859
      %v861 = vpop.f32.mrb[0].mxu0
      %862 = vmatprep.mubr.f32.mxu0 0.0
      %863 = vmatmul.mubr.f32.gmra.mrb[0].mxu0 %v733
      %v864 = vpop.f32.mrb[0].mxu0
      %v865 = vadd.f32 %v703, %v864
      %v866 = vpop.f32.mrb[0].mxu0
      %867 = vmatprep.mubr.f32.mxu0 0.0
      %868 = vmatmul.mubr.f32.gmra.mrb[0].mxu0 %v736
      %v869 = vpop.f32.mrb[0].mxu0
      %v870 = vadd.f32 %v703, %v869
      %v871 = vpop.f32.mrb[0].mxu0
      %872 = vmatprep.mubr.f32.mxu0 0.0
      %873 = vmatmul.mubr.f32.gmra.mrb[0].mxu0 %v739
      %v874 = vpop.f32.mrb[0].mxu0
      %v875 = vadd.f32 %v703, %v874
      %v876 = vpop.f32.mrb[0].mxu0
      %877 = vmatprep.mubr.f32.mxu0 0.0
      %878 = vmatmul.mubr.f32.gmra.mrb[0].mxu0 %v742
      %v879 = vpop.f32.mrb[0].mxu0
      %v880 = vadd.f32 %v703, %v879
      %v881 = vpop.f32.mrb[0].mxu0
      %882 = vmatprep.mubr.f32.mxu0 0.0
      %883 = vmatmul.mubr.f32.gmra.mrb[0].mxu0 %v745
      %v884 = vpop.f32.mrb[0].mxu0
      %v885 = vadd.f32 %v703, %v884
      %v886 = vpop.f32.mrb[0].mxu0
      %887 = vmatprep.mubr.f32.mxu0 0.0
      %888 = vmatmul.mubr.f32.gmra.mrb[0].mxu0 %v748
      %v889 = vpop.f32.mrb[0].mxu0
      %v890 = vadd.f32 %v703, %v889
      %v891 = vpop.f32.mrb[0].mxu0
      %892 = vmatprep.mubr.f32.mxu0 0.0
      %893 = vmatmul.mubr.f32.gmra.mrb[0].mxu0 %v751
      %v894 = vpop.f32.mrb[0].mxu0
      %v895 = vadd.f32 %v703, %v894
      %v896 = vpop.f32.mrb[0].mxu0
      %897 = vdwg.mxu0
      %v898 = vtanh.pop %v820
      %v899 = vtanh.pop %v825
      %v900 = vtanh.pop %v830
      %v901 = vtanh.pop %v835
      %v902 = vtanh.pop %v840
      %v903 = vtanh.pop %v845
      %v904 = vtanh.pop %v850
      %v905 = vtanh.pop %v855
      %v906 = vtanh.pop %v860
      %v907 = vtanh.pop %v865
      %v908 = vtanh.pop %v870
      %v909 = vtanh.pop %v875
      %v910 = vtanh.pop %v880
      %v911 = vtanh.pop %v885
      %v912 = vtanh.pop %v890
      %v913 = vtanh.pop %v895
      %v914 = vld [vmem:[%s1 + $0x2a0] sm:$0xff]
      %v915 = vld [vmem:[%s1 + $0x2b0] sm:$0xff]
      %v916 = vld [vmem:[%s1 + $0x2c0] sm:$0xff]
      %v917 = vld [vmem:[%s1 + $0x2d0] sm:$0xff]
      %v918 = vld [vmem:[%s2 + $0x3] ss:$0 sm:$0xff]
      %vm919 = vcmask 261120
      %v921 = vsel %vm919, %v898, 0
      %v924 = vsel %vm919, %v899, 0
      %v927 = vsel %vm919, %v900, 0
      %v930 = vsel %vm919, %v901, 0
      %v933 = vsel %vm919, %v902, 0
      %v936 = vsel %vm919, %v903, 0
      %v939 = vsel %vm919, %v904, 0
      %v942 = vsel %vm919, %v905, 0
      %v945 = vsel %vm919, %v906, 0
      %v948 = vsel %vm919, %v907, 0
      %v951 = vsel %vm919, %v908, 0
      %v954 = vsel %vm919, %v909, 0
      %v957 = vsel %vm919, %v910, 0
      %v960 = vsel %vm919, %v911, 0
      %v963 = vsel %vm919, %v912, 0
      %v966 = vsel %vm919, %v913, 0
      %968 = vmatprep.subr.mxu0 0.0
      %969 = vmatpush1.msra.mxu0 %v914
      %970 = vmatprep.subr.mxu0 0.0
      %971 = vmatpush1.msra.mxu0 %v915
      %972 = vmatprep.subr.mxu0 0.0
      %973 = vmatpush1.msra.mxu0 %v916
      %974 = vmatprep.subr.mxu0 0.0
      %975 = vmatpush1.msra.mxu0 %v917
      %976 = vmatprep.subr.mxu0 0.0
      %977 = vmatpush1.msra.mxu0 0.0
      %978 = vmatprep.subr.mxu0 0.0
      %979 = vmatpush1.msra.mxu0 0.0
      %980 = vmatprep.subr.mxu0 0.0
      %981 = vmatpush1.msra.mxu0 0.0
      %982 = vmatprep.subr.mxu0 0.0
      %983 = vmatpush1.msra.mxu0 0.0
      %984 = vmatprep.subr.mxu0 0.0
      %985 = vmatpush1.msra.mxu0 0.0
      %986 = vmatprep.subr.mxu0 0.0
      %987 = vmatpush1.msra.mxu0 0.0
      %988 = vmatprep.subr.mxu0 0.0
      %989 = vmatpush1.msra.mxu0 0.0
      %990 = vmatprep.subr.mxu0 0.0
      %991 = vmatpush1.msra.mxu0 0.0
      %992 = vmatprep.subr.mxu0 0.0
      %993 = vmatpush1.msra.mxu0 0.0
      %994 = vmatprep.subr.mxu0 0.0
      %995 = vmatpush1.msra.mxu0 0.0
      %996 = vmatprep.subr.mxu0 0.0
      %997 = vmatpush1.msra.mxu0 0.0
      %998 = vmatprep.subr.mxu0 0.0
      %999 = vmatpush1.msra.mxu0 0.0
      %1000 = vmatprep.subr.mxu0 0.0
      %1001 = vmatpush1.msra.mxu0 0.0
      %1002 = vmatprep.subr.mxu0 0.0
      %1003 = vmatpush1.msra.mxu0 0.0
      %1004 = vmatprep.subr.mxu0 0.0
      %1005 = vmatpush1.msra.mxu0 0.0
      %1006 = vmatprep.subr.mxu0 0.0
      %1007 = vmatpush1.msra.mxu0 0.0
      %1008 = vmatprep.subr.mxu0 0.0
      %1009 = vmatpush1.msra.mxu0 0.0
      %1010 = vmatprep.subr.mxu0 0.0
      %1011 = vmatpush1.msra.mxu0 0.0
      %1012 = vmatprep.subr.mxu0 0.0
      %1013 = vmatpush1.msra.mxu0 0.0
      %1014 = vmatprep.subr.mxu0 0.0
      %1015 = vmatpush1.msra.mxu0 0.0
      %1016 = vmatprep.subr.mxu0 0.0
      %1017 = vmatpush1.msra.mxu0 0.0
      %1018 = vmatprep.subr.mxu0 0.0
      %1019 = vmatpush1.msra.mxu0 0.0
      %1020 = vmatprep.subr.mxu0 0.0
      %1021 = vmatpush1.msra.mxu0 0.0
      %1022 = vmatprep.subr.mxu0 0.0
      %1023 = vmatpush1.msra.mxu0 0.0
      %1024 = vmatprep.subr.mxu0 0.0
      %1025 = vmatpush1.msra.mxu0 0.0
      %1026 = vmatprep.subr.mxu0 0.0
      %1027 = vmatpush1.msra.mxu0 0.0
      %1028 = vmatprep.subr.mxu0 0.0
      %1029 = vmatpush1.msra.mxu0 0.0
      %1030 = vmatprep.subr.mxu0 0.0
      %1031 = vmatpush1.msra.mxu0 0.0
      %1032 = vmatprep.mubr.f32.mxu0 0.0
      %1033 = vmatmul.mubr.f32.gmra.mrb[0].mxu0 %v921
      %v1034 = vpop.f32.mrb[0].mxu0
      %v1035 = vadd.f32 %v918, %v1034
      %v1036 = vpop.f32.mrb[0].mxu0
      %1037 = vmatprep.mubr.f32.mxu0 0.0
      %1038 = vmatmul.mubr.f32.gmra.mrb[0].mxu0 %v924
      %v1039 = vpop.f32.mrb[0].mxu0
      %v1040 = vadd.f32 %v918, %v1039
      %v1041 = vpop.f32.mrb[0].mxu0
      %1042 = vmatprep.mubr.f32.mxu0 0.0
      %1043 = vmatmul.mubr.f32.gmra.mrb[0].mxu0 %v927
      %v1044 = vpop.f32.mrb[0].mxu0
      %v1045 = vadd.f32 %v918, %v1044
      %v1046 = vpop.f32.mrb[0].mxu0
      %1047 = vmatprep.mubr.f32.mxu0 0.0
      %1048 = vmatmul.mubr.f32.gmra.mrb[0].mxu0 %v930
      %v1049 = vpop.f32.mrb[0].mxu0
      %v1050 = vadd.f32 %v918, %v1049
      %v1051 = vpop.f32.mrb[0].mxu0
      %1052 = vmatprep.mubr.f32.mxu0 0.0
      %1053 = vmatmul.mubr.f32.gmra.mrb[0].mxu0 %v933
      %v1054 = vpop.f32.mrb[0].mxu0
      %v1055 = vadd.f32 %v918, %v1054
      %v1056 = vpop.f32.mrb[0].mxu0
      %1057 = vmatprep.mubr.f32.mxu0 0.0
      %1058 = vmatmul.mubr.f32.gmra.mrb[0].mxu0 %v936
      %v1059 = vpop.f32.mrb[0].mxu0
      %v1060 = vadd.f32 %v918, %v1059
      %v1061 = vpop.f32.mrb[0].mxu0
      %1062 = vmatprep.mubr.f32.mxu0 0.0
      %1063 = vmatmul.mubr.f32.gmra.mrb[0].mxu0 %v939
      %v1064 = vpop.f32.mrb[0].mxu0
      %v1065 = vadd.f32 %v918, %v1064
      %v1066 = vpop.f32.mrb[0].mxu0
      %1067 = vmatprep.mubr.f32.mxu0 0.0
      %1068 = vmatmul.mubr.f32.gmra.mrb[0].mxu0 %v942
      %v1069 = vpop.f32.mrb[0].mxu0
      %v1070 = vadd.f32 %v918, %v1069
      %v1071 = vpop.f32.mrb[0].mxu0
      %1072 = vmatprep.mubr.f32.mxu0 0.0
      %1073 = vmatmul.mubr.f32.gmra.mrb[0].mxu0 %v945
      %v1074 = vpop.f32.mrb[0].mxu0
      %v1075 = vadd.f32 %v918, %v1074
      %v1076 = vpop.f32.mrb[0].mxu0
      %1077 = vmatprep.mubr.f32.mxu0 0.0
      %1078 = vmatmul.mubr.f32.gmra.mrb[0].mxu0 %v948
      %v1079 = vpop.f32.mrb[0].mxu0
      %v1080 = vadd.f32 %v918, %v1079
      %v1081 = vpop.f32.mrb[0].mxu0
      %1082 = vmatprep.mubr.f32.mxu0 0.0
      %1083 = vmatmul.mubr.f32.gmra.mrb[0].mxu0 %v951
      %v1084 = vpop.f32.mrb[0].mxu0
      %v1085 = vadd.f32 %v918, %v1084
      %v1086 = vpop.f32.mrb[0].mxu0
      %1087 = vmatprep.mubr.f32.mxu0 0.0
      %1088 = vmatmul.mubr.f32.gmra.mrb[0].mxu0 %v954
      %v1089 = vpop.f32.mrb[0].mxu0
      %v1090 = vadd.f32 %v918, %v1089
      %v1091 = vpop.f32.mrb[0].mxu0
      %1092 = vmatprep.mubr.f32.mxu0 0.0
      %1093 = vmatmul.mubr.f32.gmra.mrb[0].mxu0 %v957
      %v1094 = vpop.f32.mrb[0].mxu0
      %v1095 = vadd.f32 %v918, %v1094
      %v1096 = vpop.f32.mrb[0].mxu0
      %1097 = vmatprep.mubr.f32.mxu0 0.0
      %1098 = vmatmul.mubr.f32.gmra.mrb[0].mxu0 %v960
      %v1099 = vpop.f32.mrb[0].mxu0
      %v1100 = vadd.f32 %v918, %v1099
      %v1101 = vpop.f32.mrb[0].mxu0
      %1102 = vmatprep.mubr.f32.mxu0 0.0
      %1103 = vmatmul.mubr.f32.gmra.mrb[0].mxu0 %v963
      %v1104 = vpop.f32.mrb[0].mxu0
      %v1105 = vadd.f32 %v918, %v1104
      %v1106 = vpop.f32.mrb[0].mxu0
      %1107 = vmatprep.mubr.f32.mxu0 0.0
      %1108 = vmatmul.mubr.f32.gmra.mrb[0].mxu0 %v966
      %v1109 = vpop.f32.mrb[0].mxu0
      %v1110 = vadd.f32 %v918, %v1109
      %v1111 = vpop.f32.mrb[0].mxu0
      %1112 = vdwg.mxu0
      %v1113 = vtanh.pop %v1035
      %v1114 = vtanh.pop %v1040
      %v1115 = vtanh.pop %v1045
      %v1116 = vtanh.pop %v1050
      %v1117 = vtanh.pop %v1055
      %v1118 = vtanh.pop %v1060
      %v1119 = vtanh.pop %v1065
      %v1120 = vtanh.pop %v1070
      %v1121 = vtanh.pop %v1075
      %v1122 = vtanh.pop %v1080
      %v1123 = vtanh.pop %v1085
      %v1124 = vtanh.pop %v1090
      %v1125 = vtanh.pop %v1095
      %v1126 = vtanh.pop %v1100
      %v1127 = vtanh.pop %v1105
      %v1128 = vtanh.pop %v1110
      %v1129 = vld [vmem:[%s1 + $0x2e0] sm:$0xff]
      %v1130 = vld [vmem:[%s1 + $0x2f0] sm:$0xff]
      %v1131 = vld [vmem:[%s1 + $0x300] sm:$0xff]
      %v1132 = vld [vmem:[%s1 + $0x310] sm:$0xff]
      %v1133 = vld [vmem:[%s1 + $0x320] sm:$0xff]
      %v1134 = vld [vmem:[%s1 + $0x330] sm:$0xff]
      %v1135 = vld [vmem:[%s1 + $0x340] sm:$0xff]
      %v1136 = vld [vmem:[%s1 + $0x350] sm:$0xff]
      %v1137 = vld [vmem:[%s1 + $0x360] sm:$0xff]
      %v1138 = vld [vmem:[%s1 + $0x370] sm:$0xff]
      %v1139 = vld [vmem:[%s1 + $0x380] sm:$0xff]
      %v1140 = vld [vmem:[%s1 + $0x390] sm:$0xff]
      %v1141 = vld [vmem:[%s1 + $0x3a0] sm:$0xff]
      %v1142 = vld [vmem:[%s2 + $0x4] ss:$0 sm:$0xff]
      %vm1143 = vcmask 850944
      %v1145 = vsel %vm1143, %v1113, 0
      %v1148 = vsel %vm1143, %v1114, 0
      %v1151 = vsel %vm1143, %v1115, 0
      %v1154 = vsel %vm1143, %v1116, 0
      %v1157 = vsel %vm1143, %v1117, 0
      %v1160 = vsel %vm1143, %v1118, 0
      %v1163 = vsel %vm1143, %v1119, 0
      %v1166 = vsel %vm1143, %v1120, 0
      %v1169 = vsel %vm1143, %v1121, 0
      %v1172 = vsel %vm1143, %v1122, 0
      %v1175 = vsel %vm1143, %v1123, 0
      %v1178 = vsel %vm1143, %v1124, 0
      %v1181 = vsel %vm1143, %v1125, 0
      %v1184 = vsel %vm1143, %v1126, 0
      %v1187 = vsel %vm1143, %v1127, 0
      %v1190 = vsel %vm1143, %v1128, 0
      %1192 = vmatprep.subr.mxu0 0.0
      %1193 = vmatpush1.msra.mxu0 %v1129
      %1194 = vmatprep.subr.mxu0 0.0
      %1195 = vmatpush1.msra.mxu0 %v1130
      %1196 = vmatprep.subr.mxu0 0.0
      %1197 = vmatpush1.msra.mxu0 %v1131
      %1198 = vmatprep.subr.mxu0 0.0
      %1199 = vmatpush1.msra.mxu0 %v1132
      %1200 = vmatprep.subr.mxu0 0.0
      %1201 = vmatpush1.msra.mxu0 %v1133
      %1202 = vmatprep.subr.mxu0 0.0
      %1203 = vmatpush1.msra.mxu0 %v1134
      %1204 = vmatprep.subr.mxu0 0.0
      %1205 = vmatpush1.msra.mxu0 %v1135
      %1206 = vmatprep.subr.mxu0 0.0
      %1207 = vmatpush1.msra.mxu0 %v1136
      %1208 = vmatprep.subr.mxu0 0.0
      %1209 = vmatpush1.msra.mxu0 %v1137
      %1210 = vmatprep.subr.mxu0 0.0
      %1211 = vmatpush1.msra.mxu0 %v1138
      %1212 = vmatprep.subr.mxu0 0.0
      %1213 = vmatpush1.msra.mxu0 %v1139
      %1214 = vmatprep.subr.mxu0 0.0
      %1215 = vmatpush1.msra.mxu0 %v1140
      %1216 = vmatprep.subr.mxu0 0.0
      %1217 = vmatpush1.msra.mxu0 %v1141
      %1218 = vmatprep.subr.mxu0 0.0
      %1219 = vmatpush1.msra.mxu0 0.0
      %1220 = vmatprep.subr.mxu0 0.0
      %1221 = vmatpush1.msra.mxu0 0.0
      %1222 = vmatprep.subr.mxu0 0.0
      %1223 = vmatpush1.msra.mxu0 0.0
      %1224 = vmatprep.subr.mxu0 0.0
      %1225 = vmatpush1.msra.mxu0 0.0
      %1226 = vmatprep.subr.mxu0 0.0
      %1227 = vmatpush1.msra.mxu0 0.0
      %1228 = vmatprep.subr.mxu0 0.0
      %1229 = vmatpush1.msra.mxu0 0.0
      %1230 = vmatprep.subr.mxu0 0.0
      %1231 = vmatpush1.msra.mxu0 0.0
      %1232 = vmatprep.subr.mxu0 0.0
      %1233 = vmatpush1.msra.mxu0 0.0
      %1234 = vmatprep.subr.mxu0 0.0
      %1235 = vmatpush1.msra.mxu0 0.0
      %1236 = vmatprep.subr.mxu0 0.0
      %1237 = vmatpush1.msra.mxu0 0.0
      %1238 = vmatprep.subr.mxu0 0.0
      %1239 = vmatpush1.msra.mxu0 0.0
      %1240 = vmatprep.subr.mxu0 0.0
      %1241 = vmatpush1.msra.mxu0 0.0
      %1242 = vmatprep.subr.mxu0 0.0
      %1243 = vmatpush1.msra.mxu0 0.0
      %1244 = vmatprep.subr.mxu0 0.0
      %1245 = vmatpush1.msra.mxu0 0.0
      %1246 = vmatprep.subr.mxu0 0.0
      %1247 = vmatpush1.msra.mxu0 0.0
      %1248 = vmatprep.subr.mxu0 0.0
      %1249 = vmatpush1.msra.mxu0 0.0
      %1250 = vmatprep.subr.mxu0 0.0
      %1251 = vmatpush1.msra.mxu0 0.0
      %1252 = vmatprep.subr.mxu0 0.0
      %1253 = vmatpush1.msra.mxu0 0.0
      %1254 = vmatprep.subr.mxu0 0.0
      %1255 = vmatpush1.msra.mxu0 0.0
      %1256 = vmatprep.mubr.f32.mxu0 0.0
      %1257 = vmatmul.mubr.f32.gmra.mrb[0].mxu0 %v1145
      %v1258 = vpop.f32.mrb[0].mxu0
      %v1259 = vadd.f32 %v1142, %v1258
      %v1260 = vpop.f32.mrb[0].mxu0
      %1261 = vmatprep.mubr.f32.mxu0 0.0
      %1262 = vmatmul.mubr.f32.gmra.mrb[0].mxu0 %v1148
      %v1263 = vpop.f32.mrb[0].mxu0
      %v1264 = vadd.f32 %v1142, %v1263
      %v1265 = vpop.f32.mrb[0].mxu0
      %1266 = vmatprep.mubr.f32.mxu0 0.0
      %1267 = vmatmul.mubr.f32.gmra.mrb[0].mxu0 %v1151
      %v1268 = vpop.f32.mrb[0].mxu0
      %v1269 = vadd.f32 %v1142, %v1268
      %v1270 = vpop.f32.mrb[0].mxu0
      %1271 = vmatprep.mubr.f32.mxu0 0.0
      %1272 = vmatmul.mubr.f32.gmra.mrb[0].mxu0 %v1154
      %v1273 = vpop.f32.mrb[0].mxu0
      %v1274 = vadd.f32 %v1142, %v1273
      %v1275 = vpop.f32.mrb[0].mxu0
      %1276 = vmatprep.mubr.f32.mxu0 0.0
      %1277 = vmatmul.mubr.f32.gmra.mrb[0].mxu0 %v1157
      %v1278 = vpop.f32.mrb[0].mxu0
      %v1279 = vadd.f32 %v1142, %v1278
      %v1280 = vpop.f32.mrb[0].mxu0
      %1281 = vmatprep.mubr.f32.mxu0 0.0
      %1282 = vmatmul.mubr.f32.gmra.mrb[0].mxu0 %v1160
      %v1283 = vpop.f32.mrb[0].mxu0
      %v1284 = vadd.f32 %v1142, %v1283
      %v1285 = vpop.f32.mrb[0].mxu0
      %1286 = vmatprep.mubr.f32.mxu0 0.0
      %1287 = vmatmul.mubr.f32.gmra.mrb[0].mxu0 %v1163
      %v1288 = vpop.f32.mrb[0].mxu0
      %v1289 = vadd.f32 %v1142, %v1288
      %v1290 = vpop.f32.mrb[0].mxu0
      %1291 = vmatprep.mubr.f32.mxu0 0.0
      %1292 = vmatmul.mubr.f32.gmra.mrb[0].mxu0 %v1166
      %v1293 = vpop.f32.mrb[0].mxu0
      %v1294 = vadd.f32 %v1142, %v1293
      %v1295 = vpop.f32.mrb[0].mxu0
      %1296 = vmatprep.mubr.f32.mxu0 0.0
      %1297 = vmatmul.mubr.f32.gmra.mrb[0].mxu0 %v1169
      %v1298 = vpop.f32.mrb[0].mxu0
      %v1299 = vadd.f32 %v1142, %v1298
      %v1300 = vpop.f32.mrb[0].mxu0
      %1301 = vmatprep.mubr.f32.mxu0 0.0
      %1302 = vmatmul.mubr.f32.gmra.mrb[0].mxu0 %v1172
      %v1303 = vpop.f32.mrb[0].mxu0
      %v1304 = vadd.f32 %v1142, %v1303
      %v1305 = vpop.f32.mrb[0].mxu0
      %1306 = vmatprep.mubr.f32.mxu0 0.0
      %1307 = vmatmul.mubr.f32.gmra.mrb[0].mxu0 %v1175
      %v1308 = vpop.f32.mrb[0].mxu0
      %v1309 = vadd.f32 %v1142, %v1308
      %v1310 = vpop.f32.mrb[0].mxu0
      %1311 = vmatprep.mubr.f32.mxu0 0.0
      %1312 = vmatmul.mubr.f32.gmra.mrb[0].mxu0 %v1178
      %v1313 = vpop.f32.mrb[0].mxu0
      %v1314 = vadd.f32 %v1142, %v1313
      %v1315 = vpop.f32.mrb[0].mxu0
      %1316 = vmatprep.mubr.f32.mxu0 0.0
      %1317 = vmatmul.mubr.f32.gmra.mrb[0].mxu0 %v1181
      %v1318 = vpop.f32.mrb[0].mxu0
      %v1319 = vadd.f32 %v1142, %v1318
      %v1320 = vpop.f32.mrb[0].mxu0
      %1321 = vmatprep.mubr.f32.mxu0 0.0
      %1322 = vmatmul.mubr.f32.gmra.mrb[0].mxu0 %v1184
      %v1323 = vpop.f32.mrb[0].mxu0
      %v1324 = vadd.f32 %v1142, %v1323
      %v1325 = vpop.f32.mrb[0].mxu0
      %1326 = vmatprep.mubr.f32.mxu0 0.0
      %1327 = vmatmul.mubr.f32.gmra.mrb[0].mxu0 %v1187
      %v1328 = vpop.f32.mrb[0].mxu0
      %v1329 = vadd.f32 %v1142, %v1328
      %v1330 = vpop.f32.mrb[0].mxu0
      %1331 = vmatprep.mubr.f32.mxu0 0.0
      %1332 = vmatmul.mubr.f32.gmra.mrb[0].mxu0 %v1190
      %v1333 = vpop.f32.mrb[0].mxu0
      %v1334 = vadd.f32 %v1142, %v1333
      %v1335 = vpop.f32.mrb[0].mxu0
      %1336 = vdwg.mxu0
      %v1337 = vtanh.pop %v1259
      %v1338 = vtanh.pop %v1264
      %v1339 = vtanh.pop %v1269
      %v1340 = vtanh.pop %v1274
      %v1341 = vtanh.pop %v1279
      %v1342 = vtanh.pop %v1284
      %v1343 = vtanh.pop %v1289
      %v1344 = vtanh.pop %v1294
      %v1345 = vtanh.pop %v1299
      %v1346 = vtanh.pop %v1304
      %v1347 = vtanh.pop %v1309
      %v1348 = vtanh.pop %v1314
      %v1349 = vtanh.pop %v1319
      %v1350 = vtanh.pop %v1324
      %v1351 = vtanh.pop %v1329
      %v1352 = vtanh.pop %v1334
      %v1353 = vld [vmem:[%s1 + $0x3b0] sm:$0xff]
      %v1354 = vld [vmem:[%s1 + $0x3c0] sm:$0xff]
      %v1355 = vld [vmem:[%s1 + $0x3d0] sm:$0xff]
      %v1356 = vld [vmem:[%s1 + $0x3e0] sm:$0xff]
      %v1357 = vld [vmem:[%s1 + $0x3f0] sm:$0xff]
      %v1358 = vld [vmem:[%s1 + $0x400] sm:$0xff]
      %v1359 = vld [vmem:[%s1 + $0x410] sm:$0xff]
      %v1360 = vld [vmem:[%s2 + $0x5] ss:$0 sm:$0xff]
      %vm1361 = vcmask 457728
      %v1363 = vsel %vm1361, %v1337, 0
      %v1366 = vsel %vm1361, %v1338, 0
      %v1369 = vsel %vm1361, %v1339, 0
      %v1372 = vsel %vm1361, %v1340, 0
      %v1375 = vsel %vm1361, %v1341, 0
      %v1378 = vsel %vm1361, %v1342, 0
      %v1381 = vsel %vm1361, %v1343, 0
      %v1384 = vsel %vm1361, %v1344, 0
      %v1387 = vsel %vm1361, %v1345, 0
      %v1390 = vsel %vm1361, %v1346, 0
      %v1393 = vsel %vm1361, %v1347, 0
      %v1396 = vsel %vm1361, %v1348, 0
      %v1399 = vsel %vm1361, %v1349, 0
      %v1402 = vsel %vm1361, %v1350, 0
      %v1405 = vsel %vm1361, %v1351, 0
      %v1408 = vsel %vm1361, %v1352, 0
      %1410 = vmatprep.subr.mxu0 0.0
      %1411 = vmatpush1.msra.mxu0 %v1353
      %1412 = vmatprep.subr.mxu0 0.0
      %1413 = vmatpush1.msra.mxu0 %v1354
      %1414 = vmatprep.subr.mxu0 0.0
      %1415 = vmatpush1.msra.mxu0 %v1355
      %1416 = vmatprep.subr.mxu0 0.0
      %1417 = vmatpush1.msra.mxu0 %v1356
      %1418 = vmatprep.subr.mxu0 0.0
      %1419 = vmatpush1.msra.mxu0 %v1357
      %1420 = vmatprep.subr.mxu0 0.0
      %1421 = vmatpush1.msra.mxu0 %v1358
      %1422 = vmatprep.subr.mxu0 0.0
      %1423 = vmatpush1.msra.mxu0 %v1359
      %1424 = vmatprep.subr.mxu0 0.0
      %1425 = vmatpush1.msra.mxu0 0.0
      %1426 = vmatprep.subr.mxu0 0.0
      %1427 = vmatpush1.msra.mxu0 0.0
      %1428 = vmatprep.subr.mxu0 0.0
      %1429 = vmatpush1.msra.mxu0 0.0
      %1430 = vmatprep.subr.mxu0 0.0
      %1431 = vmatpush1.msra.mxu0 0.0
      %1432 = vmatprep.subr.mxu0 0.0
      %1433 = vmatpush1.msra.mxu0 0.0
      %1434 = vmatprep.subr.mxu0 0.0
      %1435 = vmatpush1.msra.mxu0 0.0
      %1436 = vmatprep.subr.mxu0 0.0
      %1437 = vmatpush1.msra.mxu0 0.0
      %1438 = vmatprep.subr.mxu0 0.0
      %1439 = vmatpush1.msra.mxu0 0.0
      %1440 = vmatprep.subr.mxu0 0.0
      %1441 = vmatpush1.msra.mxu0 0.0
      %1442 = vmatprep.subr.mxu0 0.0
      %1443 = vmatpush1.msra.mxu0 0.0
      %1444 = vmatprep.subr.mxu0 0.0
      %1445 = vmatpush1.msra.mxu0 0.0
      %1446 = vmatprep.subr.mxu0 0.0
      %1447 = vmatpush1.msra.mxu0 0.0
      %1448 = vmatprep.subr.mxu0 0.0
      %1449 = vmatpush1.msra.mxu0 0.0
      %1450 = vmatprep.subr.mxu0 0.0
      %1451 = vmatpush1.msra.mxu0 0.0
      %1452 = vmatprep.subr.mxu0 0.0
      %1453 = vmatpush1.msra.mxu0 0.0
      %1454 = vmatprep.subr.mxu0 0.0
      %1455 = vmatpush1.msra.mxu0 0.0
      %1456 = vmatprep.subr.mxu0 0.0
      %1457 = vmatpush1.msra.mxu0 0.0
      %1458 = vmatprep.subr.mxu0 0.0
      %1459 = vmatpush1.msra.mxu0 0.0
      %1460 = vmatprep.subr.mxu0 0.0
      %1461 = vmatpush1.msra.mxu0 0.0
      %1462 = vmatprep.subr.mxu0 0.0
      %1463 = vmatpush1.msra.mxu0 0.0
      %1464 = vmatprep.subr.mxu0 0.0
      %1465 = vmatpush1.msra.mxu0 0.0
      %1466 = vmatprep.subr.mxu0 0.0
      %1467 = vmatpush1.msra.mxu0 0.0
      %1468 = vmatprep.subr.mxu0 0.0
      %1469 = vmatpush1.msra.mxu0 0.0
      %1470 = vmatprep.subr.mxu0 0.0
      %1471 = vmatpush1.msra.mxu0 0.0
      %1472 = vmatprep.subr.mxu0 0.0
      %1473 = vmatpush1.msra.mxu0 0.0
      %1474 = vmatprep.mubr.f32.mxu0 0.0
      %1475 = vmatmul.mubr.f32.gmra.mrb[0].mxu0 %v1363
      %v1476 = vpop.f32.mrb[0].mxu0
      %v1477 = vadd.f32 %v1360, %v1476
      %v1478 = vpop.f32.mrb[0].mxu0
      %1479 = vmatprep.mubr.f32.mxu0 0.0
      %1480 = vmatmul.mubr.f32.gmra.mrb[0].mxu0 %v1366
      %v1481 = vpop.f32.mrb[0].mxu0
      %v1482 = vadd.f32 %v1360, %v1481
      %v1483 = vpop.f32.mrb[0].mxu0
      %1484 = vmatprep.mubr.f32.mxu0 0.0
      %1485 = vmatmul.mubr.f32.gmra.mrb[0].mxu0 %v1369
      %v1486 = vpop.f32.mrb[0].mxu0
      %v1487 = vadd.f32 %v1360, %v1486
      %v1488 = vpop.f32.mrb[0].mxu0
      %1489 = vmatprep.mubr.f32.mxu0 0.0
      %1490 = vmatmul.mubr.f32.gmra.mrb[0].mxu0 %v1372
      %v1491 = vpop.f32.mrb[0].mxu0
      %v1492 = vadd.f32 %v1360, %v1491
      %v1493 = vpop.f32.mrb[0].mxu0
      %1494 = vmatprep.mubr.f32.mxu0 0.0
      %1495 = vmatmul.mubr.f32.gmra.mrb[0].mxu0 %v1375
      %v1496 = vpop.f32.mrb[0].mxu0
      %v1497 = vadd.f32 %v1360, %v1496
      %v1498 = vpop.f32.mrb[0].mxu0
      %1499 = vmatprep.mubr.f32.mxu0 0.0
      %1500 = vmatmul.mubr.f32.gmra.mrb[0].mxu0 %v1378
      %v1501 = vpop.f32.mrb[0].mxu0
      %v1502 = vadd.f32 %v1360, %v1501
      %v1503 = vpop.f32.mrb[0].mxu0
      %1504 = vmatprep.mubr.f32.mxu0 0.0
      %1505 = vmatmul.mubr.f32.gmra.mrb[0].mxu0 %v1381
      %v1506 = vpop.f32.mrb[0].mxu0
      %v1507 = vadd.f32 %v1360, %v1506
      %v1508 = vpop.f32.mrb[0].mxu0
      %1509 = vmatprep.mubr.f32.mxu0 0.0
      %1510 = vmatmul.mubr.f32.gmra.mrb[0].mxu0 %v1384
      %v1511 = vpop.f32.mrb[0].mxu0
      %v1512 = vadd.f32 %v1360, %v1511
      %v1513 = vpop.f32.mrb[0].mxu0
      %1514 = vmatprep.mubr.f32.mxu0 0.0
      %1515 = vmatmul.mubr.f32.gmra.mrb[0].mxu0 %v1387
      %v1516 = vpop.f32.mrb[0].mxu0
      %v1517 = vadd.f32 %v1360, %v1516
      %v1518 = vpop.f32.mrb[0].mxu0
      %1519 = vmatprep.mubr.f32.mxu0 0.0
      %1520 = vmatmul.mubr.f32.gmra.mrb[0].mxu0 %v1390
      %v1521 = vpop.f32.mrb[0].mxu0
      %v1522 = vadd.f32 %v1360, %v1521
      %v1523 = vpop.f32.mrb[0].mxu0
      %1524 = vmatprep.mubr.f32.mxu0 0.0
      %1525 = vmatmul.mubr.f32.gmra.mrb[0].mxu0 %v1393
      %v1526 = vpop.f32.mrb[0].mxu0
      %v1527 = vadd.f32 %v1360, %v1526
      %v1528 = vpop.f32.mrb[0].mxu0
      %1529 = vmatprep.mubr.f32.mxu0 0.0
      %1530 = vmatmul.mubr.f32.gmra.mrb[0].mxu0 %v1396
      %v1531 = vpop.f32.mrb[0].mxu0
      %v1532 = vadd.f32 %v1360, %v1531
      %v1533 = vpop.f32.mrb[0].mxu0
      %1534 = vmatprep.mubr.f32.mxu0 0.0
      %1535 = vmatmul.mubr.f32.gmra.mrb[0].mxu0 %v1399
      %v1536 = vpop.f32.mrb[0].mxu0
      %v1537 = vadd.f32 %v1360, %v1536
      %v1538 = vpop.f32.mrb[0].mxu0
      %1539 = vmatprep.mubr.f32.mxu0 0.0
      %1540 = vmatmul.mubr.f32.gmra.mrb[0].mxu0 %v1402
      %v1541 = vpop.f32.mrb[0].mxu0
      %v1542 = vadd.f32 %v1360, %v1541
      %v1543 = vpop.f32.mrb[0].mxu0
      %1544 = vmatprep.mubr.f32.mxu0 0.0
      %1545 = vmatmul.mubr.f32.gmra.mrb[0].mxu0 %v1405
      %v1546 = vpop.f32.mrb[0].mxu0
      %v1547 = vadd.f32 %v1360, %v1546
      %v1548 = vpop.f32.mrb[0].mxu0
      %1549 = vmatprep.mubr.f32.mxu0 0.0
      %1550 = vmatmul.mubr.f32.gmra.mrb[0].mxu0 %v1408
      %v1551 = vpop.f32.mrb[0].mxu0
      %v1552 = vadd.f32 %v1360, %v1551
      %v1553 = vpop.f32.mrb[0].mxu0
      %1554 = vdwg.mxu0
      %vm1555 = vcmask 7168
      %1556 = vst.msk [vmem:[%s172] sm:$0xff] %vm1555, %v1477
      %1557 = vst.msk [vmem:[%s172 + $0x8] sm:$0xff] %vm1555, %v1482
      %1558 = vst.msk [vmem:[%s172 + $0x10] sm:$0xff] %vm1555, %v1487
      %1559 = vst.msk [vmem:[%s172 + $0x18] sm:$0xff] %vm1555, %v1492
      %1560 = vst.msk [vmem:[%s172 + $0x20] sm:$0xff] %vm1555, %v1497
      %1561 = vst.msk [vmem:[%s172 + $0x28] sm:$0xff] %vm1555, %v1502
      %1562 = vst.msk [vmem:[%s172 + $0x30] sm:$0xff] %vm1555, %v1507
      %1563 = vst.msk [vmem:[%s172 + $0x38] sm:$0xff] %vm1555, %v1512
      %1564 = vst.msk [vmem:[%s172 + $0x40] sm:$0xff] %vm1555, %v1517
      %1565 = vst.msk [vmem:[%s172 + $0x48] sm:$0xff] %vm1555, %v1522
      %1566 = vst.msk [vmem:[%s172 + $0x50] sm:$0xff] %vm1555, %v1527
      %1567 = vst.msk [vmem:[%s172 + $0x58] sm:$0xff] %vm1555, %v1532
      %1568 = vst.msk [vmem:[%s172 + $0x60] sm:$0xff] %vm1555, %v1537
      %1569 = vst.msk [vmem:[%s172 + $0x68] sm:$0xff] %vm1555, %v1542
      %1570 = vst.msk [vmem:[%s172 + $0x70] sm:$0xff] %vm1555, %v1547
      %1571 = vst.msk [vmem:[%s172 + $0x78] sm:$0xff] %vm1555, %v1552
      %s1572 = smul.u32 16, %s14
      %p1573 = scmp.lt.s32.totalorder %s1572, 63
      %s1574 = scalar_select %p1573, %s1572, 63
      %s1575 = smul.addr %s1574, 8
      %s1576 = scalar_lea.vmem %s3, %s1575
      // Predicated region
      $region33: #{value_network_forward_batched.1} parent=31 // pred_check
        %p1577 = pneg %p100
      $region34: #{value_network_forward_batched.1} parent=31 // pred_check_branch
        %1579 = sbr.rel (%p1577) target = $region36
      $region35: #{value_network_forward_batched.1} parent=31 // pred_region
        %s1580 = smul.u32 16, %s14
      $region36: #{value_network_forward_batched.1} parent=31 // pred_fallthru
        _
    $region32: #{value_network_forward_batched.1} parent=5 // pred_fallthru
      _
    %p1581 = scmp.le.s32.totalorder 2, %s9
    // Predicated region
    $region37: #{value_network_forward_batched.1} parent=5 // pred_check
      %p1582 = pneg %p1581
    $region38: #{value_network_forward_batched.1} parent=5 // pred_check_branch
      %1584 = sbr.rel (%p1582) target = $region40
    $region39: #{value_network_forward_batched.1} parent=5 // pred_region
      %s1585 = ssub.s32 %s9, 2
      // Predicated region
      $region41: #{value_network_forward_batched.1} parent=39 // pred_check
        %p1586 = pneg %p106
      $region42: #{value_network_forward_batched.1} parent=39 // pred_check_branch
        %1588 = sbr.rel (%p1586) target = $region44
      $region43: #{value_network_forward_batched.1} parent=39 // pred_region
        %s1589 = smul.u32 16, %s15
        %p1590 = scmp.lt.s32.totalorder %s1589, 63
        %s1591 = scalar_select %p1590, %s1589, 63
        %s1592 = smul.addr %s1591, 8
        %s1593 = scalar_lea.vmem %s3, %s1592
      $region44: #{value_network_forward_batched.1} parent=39 // pred_fallthru
        _
    $region40: #{value_network_forward_batched.1} parent=5 // pred_fallthru
      _
  $region6: #{value_network_forward_batched.1} parent=0 // loop_footer
    %s13 = sadd.s32 1, %s9
  $region7: #{value_network_forward_batched.1} parent=0 // loop_footer_branch
    %8 = sbr.rel target = $region3
  $region8: #{value_network_forward_batched.1} parent=0 // loop_exit
    _

</llo_original>
